<compile_context>
chip_gen: v5e
topology: v5e:2x2
jax: 0.10.0
libtpu: 0.0.40
codegen_flags: <defaults>
</compile_context>

<pallas_src>
import jax
import jax.numpy as jnp
from jax.experimental import pallas as pl
from jax.experimental.pallas import tpu as pltpu

EPS = 1e-5  # BatchNorm2d default eps


# ----------------------------- Pallas kernels ------------------------------ #

def _conv_stats_kernel(x_ref, w_ref, b_ref, out_ref, stats_ref):
    # x_ref:     (1, H+2, W+2, Cin)  padded ORIGINAL-resolution input (per batch, resident)
    # w_ref:     (9*Cin, 4*Cout)     upsample-folded im2col weights
    # b_ref:     (1, 4*Cout)         conv bias tiled over the 4 (dr,dc) positions
    # out_ref:   (TP, W, 4*Cout)     conv+bias tile; lanes ordered (dr, dc, cout)
    # stats_ref: (1, 2, 4*Cout)      per-tile [sum, sum_of_squares]
    TP, W, C4 = out_ref.shape
    Cin = x_ref.shape[3]
    t = pl.program_id(1)
    row0 = pl.multiple_of(t * TP, TP)

    # Rows [t*TP, t*TP + TP + 1] of the padded original input (halo of 1 each side).
    xt = x_ref[0, pl.ds(row0, TP + 2), :, :]                  # (TP+2, W+2, Cin)

    # im2col over the 3x3 (a, b) support at ORIGINAL resolution -> ONE contraction.
    taps = []
    for a in range(3):
        for b in range(3):
            taps.append(xt[a:a + TP, b:b + W, :].reshape(TP * W, Cin))
    patch = jnp.concatenate(taps, axis=-1)                    # (TP*W, 9*Cin)

    r = jnp.dot(patch, w_ref[...], preferred_element_type=jnp.float32)
    r = r + b_ref[...]                                        # (TP*W, 4*Cout)

    out_ref[...] = r.reshape(TP, W, C4)

    # Per-tile partial BatchNorm statistics (global reduction finished in wrapper).
    s = jnp.sum(r, axis=0, keepdims=True)                     # (1, 4*Cout)
    ss = jnp.sum(r * r, axis=0, keepdims=True)                # (1, 4*Cout)
    stats_ref[0] = jnp.concatenate([s, ss], axis=0)           # (2, 4*Cout)


def _bn_relu_kernel(x_ref, scale_ref, shift_ref, o_ref):
    # x_ref/o_ref: (TP, W, 4*Cout); scale/shift: (1, 4*Cout) resident per-lane params.
    o_ref[...] = jnp.maximum(x_ref[...] * scale_ref[...] + shift_ref[...], 0.0)


# ------------------------------- wrapper ----------------------------------- #

def _pick_row_tile(H, W, C4):
    """Largest divisor of H keeping the f32 conv tile (TP, W, 4*Cout) around <=2 MiB,
    so double-buffered tiles stay far inside the default scoped VMEM on all chips
    (32 MiB on v6e/v7x) while amortizing the ~0.35us per-grid-step overhead."""
    budget_rows = max(1, (2 << 20) // max(1, W * C4 * 4))
    tp = 1
    for cand in range(1, H + 1):
        if H % cand == 0 and cand <= budget_rows:
            tp = cand
    return tp


def upconv(x_nchw, w_oihw, bias, gamma, beta):
    """x_nchw: (N, Cin, H, W) float32.  Returns (N, Cout, 2H, 2W) float32."""
    f32 = jnp.float32
    N, Cin, H, W = x_nchw.shape
    Cout = w_oihw.shape[0]
    C4 = 4 * Cout

    # Glue at ORIGINAL resolution only: NCHW -> NHWC, zero pad H/W by 1.
    x_nhwc = jnp.transpose(x_nchw.astype(f32), (0, 2, 3, 1))   # (N, H, W, Cin)
    x_pad = jnp.pad(x_nhwc, ((0, 0), (1, 1), (1, 1), (0, 0)))  # (N, H+2, W+2, Cin)

    # Fold the 2x nearest upsample into the conv weights:
    #   y[2p+dr, 2q+dc, co] = sum_{a,b,ci} Wc[a,b,ci,dr,dc,co] * x_pad[p+a, q+b, ci]
    # S[d, a, ky] selects which original 3x3 taps collapse onto offset a for parity d.
    S = jnp.array([[[1, 0, 0], [0, 1, 1], [0, 0, 0]],          # dr/dc = 0
                   [[0, 0, 0], [1, 1, 0], [0, 0, 1]]], f32)    # dr/dc = 1
    Wc = jnp.einsum('ray,sbx,oiyx->abirso', S, S, w_oihw.astype(f32))
    w_big = Wc.reshape(9 * Cin, C4)                            # rows (a,b,ci), cols (dr,dc,co)
    b4 = jnp.tile(bias.astype(f32), 4).reshape(1, C4)

    TP = _pick_row_tile(H, W, C4)
    n_t = H // TP

    # ---- Phase 1: tiled conv (+bias) and partial BN statistics ----
    conv_slab, stats = pl.pallas_call(
        _conv_stats_kernel,
        out_shape=(
            jax.ShapeDtypeStruct((N * H, W, C4), f32),
            jax.ShapeDtypeStruct((N * n_t, 2, C4), f32),
        ),
        grid=(N, n_t),
        in_specs=[
            pl.BlockSpec((1, H + 2, W + 2, Cin), lambda n, t: (n, 0, 0, 0)),
            pl.BlockSpec((9 * Cin, C4), lambda n, t: (0, 0)),
            pl.BlockSpec((1, C4), lambda n, t: (0, 0)),
        ],
        out_specs=(
            pl.BlockSpec((TP, W, C4), lambda n, t: (n * n_t + t, 0, 0)),
            pl.BlockSpec((1, 2, C4), lambda n, t: (n * n_t + t, 0, 0)),
        ),
        compiler_params=pltpu.CompilerParams(
            dimension_semantics=("parallel", "parallel")),
    )(x_pad, w_big, b4)

    # ---- Tiny glue: global BN statistics -> fused scale/shift ----
    count = float(N * 4 * H * W)                               # N * (2H) * (2W)
    tot = stats.sum(axis=0)                                    # (2, 4*Cout)
    sum_c = tot[0].reshape(4, Cout).sum(axis=0)
    sumsq_c = tot[1].reshape(4, Cout).sum(axis=0)
    mean = sum_c / count
    var = jnp.maximum(sumsq_c / count - mean * mean, 0.0)      # biased (training-mode)
    scale = gamma.astype(f32) * jax.lax.rsqrt(var + EPS)
    shift = beta.astype(f32) - mean * scale
    scale4 = jnp.tile(scale, 4).reshape(1, C4)
    shift4 = jnp.tile(shift, 4).reshape(1, C4)

    # ---- Phase 2: fused BN-apply + ReLU (fully parallel, in-place over the slab) ----
    y_slab = pl.pallas_call(
        _bn_relu_kernel,
        out_shape=jax.ShapeDtypeStruct((N * H, W, C4), f32),
        grid=(N * n_t,),
        in_specs=[
            pl.BlockSpec((TP, W, C4), lambda i: (i, 0, 0)),
            pl.BlockSpec((1, C4), lambda i: (0, 0)),
            pl.BlockSpec((1, C4), lambda i: (0, 0)),
        ],
        out_specs=pl.BlockSpec((TP, W, C4), lambda i: (i, 0, 0)),
        input_output_aliases={0: 0},                            # reuse conv slab buffer
        compiler_params=pltpu.CompilerParams(
            dimension_semantics=("parallel",)),
    )(conv_slab, scale4, shift4)

    # Single layout fix-up back to NCHW (would be needed for any NHWC-style kernel).
    y = y_slab.reshape(N, H, W, 2, 2, Cout)                    # (n, p, q, dr, dc, co)
    y = jnp.transpose(y, (0, 5, 1, 3, 2, 4)).reshape(N, Cout, 2 * H, 2 * W)
    return y


# ------------------------------ reference ---------------------------------- #

def upconv_reference(x_nchw, w_oihw, bias, gamma, beta):
    """Pure-JAX reference matching the PyTorch forward (training-mode BN)."""
    xu = jnp.repeat(jnp.repeat(x_nchw, 2, axis=2), 2, axis=3)
    y = jax.lax.conv_general_dilated(
        xu, w_oihw, window_strides=(1, 1), padding=((1, 1), (1, 1)),
        dimension_numbers=("NCHW", "OIHW", "NCHW"))
    y = y + bias[None, :, None, None]
    mean = y.mean(axis=(0, 2, 3), keepdims=True)
    var = ((y - mean) ** 2).mean(axis=(0, 2, 3), keepdims=True)
    y = (y - mean) * jax.lax.rsqrt(var + EPS)
    y = y * gamma[None, :, None, None] + beta[None, :, None, None]
    return jnp.maximum(y, 0.0)


if __name__ == "__main__":
    # Small shapes consistent with the module: NCHW input.
    N, Cin, Cout, H, W = 2, 4, 8, 16, 16

    key = jax.random.PRNGKey(0)
    kx, kw, kb = jax.random.split(key, 3)

    x = jax.random.normal(kx, (N, Cin, H, W), dtype=jnp.float32)

    # Deterministic parameter init (PyTorch-style uniform bound for conv).
    fan_in = Cin * 3 * 3
    bound = 1.0 / jnp.sqrt(fan_in)
    w = jax.random.uniform(kw, (Cout, Cin, 3, 3), jnp.float32, -bound, bound)
    b = jax.random.uniform(kb, (Cout,), jnp.float32, -bound, bound)
    gamma = jnp.ones((Cout,), jnp.float32)   # BatchNorm2d default weight
    beta = jnp.zeros((Cout,), jnp.float32)   # BatchNorm2d default bias

    out = jax.jit(upconv)(x, w, b, gamma, beta)
    out = jax.block_until_ready(out)

    ref = jax.block_until_ready(upconv_reference(x, w, b, gamma, beta))
    assert out.shape == (N, Cout, 2 * H, 2 * W), out.shape
    assert jnp.allclose(out, ref, atol=1e-3, rtol=1e-3), \
        float(jnp.max(jnp.abs(out - ref)))

    print("KERNEL_OK")
</pallas_src>

<mosaic_0001>
module attributes {stable_mosaic.version = 11 : i64} {
  func.func @_conv_stats_kernel(%arg0: i32, %arg1: i32, %arg2: memref<1x18x18x4xf32, #tpu.memory_space<vmem>>, %arg3: memref<36x32xf32, #tpu.memory_space<vmem>>, %arg4: memref<1x32xf32, #tpu.memory_space<vmem>>, %arg5: memref<16x16x32xf32, #tpu.memory_space<vmem>>, %arg6: memref<1x2x32xf32, #tpu.memory_space<vmem>>) attributes {dimension_semantics = [#tpu.dimension_semantics<parallel>, #tpu.dimension_semantics<parallel>], iteration_bounds = array<i64: 2, 1>, scalar_prefetch = 0 : i64, scratch_operands = 0 : i64, tpu.core_type = #tpu.core_type<tc>, window_params = [{transform_indices = @transform_0, window_bounds = array<i64: 1, 18, 18, 4>}, {pipeline_mode = #tpu.pipeline_mode<synchronous>, transform_indices = @transform_1, window_bounds = array<i64: 36, 32>}, {pipeline_mode = #tpu.pipeline_mode<synchronous>, transform_indices = @transform_2, window_bounds = array<i64: 1, 32>}, {transform_indices = @transform_3, window_bounds = array<i64: 16, 16, 32>}, {transform_indices = @transform_4, window_bounds = array<i64: 1, 2, 32>}]} {
    %c16_i32 = arith.constant 16 : i32
    %0 = arith.muli %arg1, %c16_i32 : i32
    %1 = tpu.assume_multiple %0, 16 : i32
    %c0 = arith.constant 0 : index
    %2 = arith.index_cast %1 : i32 to index
    %c0_0 = arith.constant 0 : index
    %c0_1 = arith.constant 0 : index
    %3 = vector.load %arg2[%c0, %2, %c0_0, %c0_1] : memref<1x18x18x4xf32, #tpu.memory_space<vmem>>, vector<1x18x18x4xf32>
    %4 = vector.shape_cast %3 : vector<1x18x18x4xf32> to vector<18x18x4xf32>
    %5 = vector.extract_strided_slice %4 {offsets = [0, 0, 0], sizes = [16, 16, 4], strides = [1, 1, 1]} : vector<18x18x4xf32> to vector<16x16x4xf32>
    %6 = vector.shape_cast %5 : vector<16x16x4xf32> to vector<256x4xf32>
    %7 = vector.extract_strided_slice %4 {offsets = [0, 1, 0], sizes = [16, 16, 4], strides = [1, 1, 1]} : vector<18x18x4xf32> to vector<16x16x4xf32>
    %8 = vector.shape_cast %7 : vector<16x16x4xf32> to vector<256x4xf32>
    %9 = vector.extract_strided_slice %4 {offsets = [0, 2, 0], sizes = [16, 16, 4], strides = [1, 1, 1]} : vector<18x18x4xf32> to vector<16x16x4xf32>
    %10 = vector.shape_cast %9 : vector<16x16x4xf32> to vector<256x4xf32>
    %11 = vector.extract_strided_slice %4 {offsets = [1, 0, 0], sizes = [16, 16, 4], strides = [1, 1, 1]} : vector<18x18x4xf32> to vector<16x16x4xf32>
    %12 = vector.shape_cast %11 : vector<16x16x4xf32> to vector<256x4xf32>
    %13 = vector.extract_strided_slice %4 {offsets = [1, 1, 0], sizes = [16, 16, 4], strides = [1, 1, 1]} : vector<18x18x4xf32> to vector<16x16x4xf32>
    %14 = vector.shape_cast %13 : vector<16x16x4xf32> to vector<256x4xf32>
    %15 = vector.extract_strided_slice %4 {offsets = [1, 2, 0], sizes = [16, 16, 4], strides = [1, 1, 1]} : vector<18x18x4xf32> to vector<16x16x4xf32>
    %16 = vector.shape_cast %15 : vector<16x16x4xf32> to vector<256x4xf32>
    %17 = vector.extract_strided_slice %4 {offsets = [2, 0, 0], sizes = [16, 16, 4], strides = [1, 1, 1]} : vector<18x18x4xf32> to vector<16x16x4xf32>
    %18 = vector.shape_cast %17 : vector<16x16x4xf32> to vector<256x4xf32>
    %19 = vector.extract_strided_slice %4 {offsets = [2, 1, 0], sizes = [16, 16, 4], strides = [1, 1, 1]} : vector<18x18x4xf32> to vector<16x16x4xf32>
    %20 = vector.shape_cast %19 : vector<16x16x4xf32> to vector<256x4xf32>
    %21 = vector.extract_strided_slice %4 {offsets = [2, 2, 0], sizes = [16, 16, 4], strides = [1, 1, 1]} : vector<18x18x4xf32> to vector<16x16x4xf32>
    %22 = vector.shape_cast %21 : vector<16x16x4xf32> to vector<256x4xf32>
    %23 = tpu.concatenate %6, %8, %10, %12, %14, %16, %18, %20, %22 in 1 : vector<256x4xf32>, vector<256x4xf32>, vector<256x4xf32>, vector<256x4xf32>, vector<256x4xf32>, vector<256x4xf32>, vector<256x4xf32>, vector<256x4xf32>, vector<256x4xf32> -> vector<256x36xf32>
    %c0_2 = arith.constant 0 : index
    %c0_3 = arith.constant 0 : index
    %24 = vector.load %arg3[%c0_2, %c0_3] : memref<36x32xf32, #tpu.memory_space<vmem>>, vector<36x32xf32>
    %cst = arith.constant dense<0.000000e+00> : vector<256x32xf32>
    %25 = tpu.matmul %23, %24, %cst {dimension_numbers = #tpu.dot_dimension_numbers<[1], [0], [0], [1], [0, 0, 1, 1], [], []>} : vector<256x36xf32>, vector<36x32xf32>, vector<256x32xf32> -> vector<256x32xf32>
    %c0_4 = arith.constant 0 : index
    %c0_5 = arith.constant 0 : index
    %26 = vector.load %arg4[%c0_4, %c0_5] : memref<1x32xf32, #tpu.memory_space<vmem>>, vector<1x32xf32>
    %27 = vector.broadcast %26 : vector<1x32xf32> to vector<256x32xf32>
    %28 = arith.addf %25, %27 : vector<256x32xf32>
    %29 = vector.shape_cast %28 : vector<256x32xf32> to vector<16x16x32xf32>
    %c0_6 = arith.constant 0 : index
    %c0_7 = arith.constant 0 : index
    %c0_8 = arith.constant 0 : index
    %30 = vector.load %arg5[%c0_6, %c0_7, %c0_8] : memref<16x16x32xf32, #tpu.memory_space<vmem>>, vector<16x16x32xf32>
    tpu.vector_store %arg5[%c0_6, %c0_7, %c0_8], %29 {strides = array<i32>} : memref<16x16x32xf32, #tpu.memory_space<vmem>>, vector<16x16x32xf32>,
    %cst_9 = arith.constant dense<0.000000e+00> : vector<32xf32>
    %31 = vector.multi_reduction <add>, %28, %cst_9 [0] : vector<256x32xf32> to vector<32xf32>
    %32 = vector.shape_cast %31 : vector<32xf32> to vector<1x32xf32>
    %33 = arith.mulf %28, %28 : vector<256x32xf32>
    %cst_10 = arith.constant dense<0.000000e+00> : vector<32xf32>
    %34 = vector.multi_reduction <add>, %33, %cst_10 [0] : vector<256x32xf32> to vector<32xf32>
    %35 = vector.shape_cast %34 : vector<32xf32> to vector<1x32xf32>
    %36 = tpu.concatenate %32, %35 in 0 : vector<1x32xf32>, vector<1x32xf32> -> vector<2x32xf32>
    %c0_11 = arith.constant 0 : index
    %c0_12 = arith.constant 0 : index
    %c0_13 = arith.constant 0 : index
    %37 = vector.load %arg6[%c0_11, %c0_12, %c0_13] : memref<1x2x32xf32, #tpu.memory_space<vmem>>, vector<1x2x32xf32>
    %38 = vector.shape_cast %37 : vector<1x2x32xf32> to vector<2x32xf32>
    %39 = vector.shape_cast %36 : vector<2x32xf32> to vector<1x2x32xf32>
    tpu.vector_store %arg6[%c0_11, %c0_12, %c0_13], %39 {strides = array<i32>} : memref<1x2x32xf32, #tpu.memory_space<vmem>>, vector<1x2x32xf32>,
    return
  }
  func.func @transform_0(%arg0: i32, %arg1: i32) -> (i32, i32, i32, i32) {
    %c0_i32 = arith.constant 0 : i32
    %c0_i32_0 = arith.constant 0 : i32
    %c0_i32_1 = arith.constant 0 : i32
    %c0_i32_2 = arith.constant 0 : i32
    return %arg0, %c0_i32, %c0_i32_0, %c0_i32_1 : i32, i32, i32, i32
  }
  func.func @transform_1(%arg0: i32, %arg1: i32) -> (i32, i32) {
    %c0_i32 = arith.constant 0 : i32
    %c0_i32_0 = arith.constant 0 : i32
    %c0_i32_1 = arith.constant 0 : i32
    return %c0_i32, %c0_i32_0 : i32, i32
  }
  func.func @transform_2(%arg0: i32, %arg1: i32) -> (i32, i32) {
    %c0_i32 = arith.constant 0 : i32
    %c0_i32_0 = arith.constant 0 : i32
    %c0_i32_1 = arith.constant 0 : i32
    return %c0_i32, %c0_i32_0 : i32, i32
  }
  func.func @transform_3(%arg0: i32, %arg1: i32) -> (i32, i32, i32) {
    %c1_i32 = arith.constant 1 : i32
    %0 = arith.muli %arg0, %c1_i32 : i32
    %1 = arith.addi %0, %arg1 : i32
    %c0_i32 = arith.constant 0 : i32
    %c0_i32_0 = arith.constant 0 : i32
    %c0_i32_1 = arith.constant 0 : i32
    return %1, %c0_i32, %c0_i32_0 : i32, i32, i32
  }
  func.func @transform_4(%arg0: i32, %arg1: i32) -> (i32, i32, i32) {
    %c1_i32 = arith.constant 1 : i32
    %0 = arith.muli %arg0, %c1_i32 : i32
    %1 = arith.addi %0, %arg1 : i32
    %c0_i32 = arith.constant 0 : i32
    %c0_i32_0 = arith.constant 0 : i32
    %c0_i32_1 = arith.constant 0 : i32
    return %1, %c0_i32, %c0_i32_0 : i32, i32, i32
  }
}

module attributes {stable_mosaic.version = 11 : i64} {
  func.func @_bn_relu_kernel(%arg0: i32, %arg1: memref<16x16x32xf32, #tpu.memory_space<vmem>>, %arg2: memref<1x32xf32, #tpu.memory_space<vmem>>, %arg3: memref<1x32xf32, #tpu.memory_space<vmem>>, %arg4: memref<16x16x32xf32, #tpu.memory_space<vmem>>) attributes {dimension_semantics = [#tpu.dimension_semantics<parallel>], iteration_bounds = array<i64: 2>, scalar_prefetch = 0 : i64, scratch_operands = 0 : i64, tpu.core_type = #tpu.core_type<tc>, window_params = [{transform_indices = @transform_0, window_bounds = array<i64: 16, 16, 32>}, {pipeline_mode = #tpu.pipeline_mode<synchronous>, transform_indices = @transform_1, window_bounds = array<i64: 1, 32>}, {pipeline_mode = #tpu.pipeline_mode<synchronous>, transform_indices = @transform_2, window_bounds = array<i64: 1, 32>}, {transform_indices = @transform_3, window_bounds = array<i64: 16, 16, 32>}]} {
    %c0 = arith.constant 0 : index
    %c0_0 = arith.constant 0 : index
    %c0_1 = arith.constant 0 : index
    %0 = vector.load %arg1[%c0, %c0_0, %c0_1] : memref<16x16x32xf32, #tpu.memory_space<vmem>>, vector<16x16x32xf32>
    %c0_2 = arith.constant 0 : index
    %c0_3 = arith.constant 0 : index
    %1 = vector.load %arg2[%c0_2, %c0_3] : memref<1x32xf32, #tpu.memory_space<vmem>>, vector<1x32xf32>
    %2 = vector.shape_cast %1 : vector<1x32xf32> to vector<1x1x32xf32>
    %3 = vector.broadcast %2 : vector<1x1x32xf32> to vector<16x16x32xf32>
    %4 = arith.mulf %0, %3 : vector<16x16x32xf32>
    %c0_4 = arith.constant 0 : index
    %c0_5 = arith.constant 0 : index
    %5 = vector.load %arg3[%c0_4, %c0_5] : memref<1x32xf32, #tpu.memory_space<vmem>>, vector<1x32xf32>
    %6 = vector.shape_cast %5 : vector<1x32xf32> to vector<1x1x32xf32>
    %7 = vector.broadcast %6 : vector<1x1x32xf32> to vector<16x16x32xf32>
    %8 = arith.addf %4, %7 : vector<16x16x32xf32>
    %cst = arith.constant 0.000000e+00 : f32
    %9 = vector.broadcast %cst : f32 to vector<16x16x32xf32>
    %10 = arith.maximumf %8, %9 : vector<16x16x32xf32>
    %c0_6 = arith.constant 0 : index
    %c0_7 = arith.constant 0 : index
    %c0_8 = arith.constant 0 : index
    %11 = vector.load %arg4[%c0_6, %c0_7, %c0_8] : memref<16x16x32xf32, #tpu.memory_space<vmem>>, vector<16x16x32xf32>
    tpu.vector_store %arg4[%c0_6, %c0_7, %c0_8], %10 {strides = array<i32>} : memref<16x16x32xf32, #tpu.memory_space<vmem>>, vector<16x16x32xf32>,
    return
  }
  func.func @transform_0(%arg0: i32) -> (i32, i32, i32) {
    %c0_i32 = arith.constant 0 : i32
    %c0_i32_0 = arith.constant 0 : i32
    %c0_i32_1 = arith.constant 0 : i32
    return %arg0, %c0_i32, %c0_i32_0 : i32, i32, i32
  }
  func.func @transform_1(%arg0: i32) -> (i32, i32) {
    %c0_i32 = arith.constant 0 : i32
    %c0_i32_0 = arith.constant 0 : i32
    %c0_i32_1 = arith.constant 0 : i32
    return %c0_i32, %c0_i32_0 : i32, i32
  }
  func.func @transform_2(%arg0: i32) -> (i32, i32) {
    %c0_i32 = arith.constant 0 : i32
    %c0_i32_0 = arith.constant 0 : i32
    %c0_i32_1 = arith.constant 0 : i32
    return %c0_i32, %c0_i32_0 : i32, i32
  }
  func.func @transform_3(%arg0: i32) -> (i32, i32, i32) {
    %c0_i32 = arith.constant 0 : i32
    %c0_i32_0 = arith.constant 0 : i32
    %c0_i32_1 = arith.constant 0 : i32
    return %arg0, %c0_i32, %c0_i32_0 : i32, i32, i32
  }
}

</mosaic_0001>

<llo_original>
// kernel: tile.19
$region0: #{tile.19}
  %s0 = inlined_call_operand.vmem [shape: f32[4,8], index: 0, kind: input, shape index: {}]
  %s1 = inlined_call_operand.vmem [shape: f32[1,32], index: 1, kind: output, shape index: {}]
  $region1: #{tile.19} parent=0
    #allocation0 [shape = 'u8[4096]{0}', space=vmem, size = 0x1000, scoped, tag = 'scoped mem for output reshape']
    #allocation1 [shape = 'u8[4096]{0}', space=vmem, size = 0x1000, scoped, tag = 'scoped mem for input reshape']
    %s3 = ssub.s32 16, 1
    %v4 = vld [vmem:[%s0] sm:%s3]
    %5 = vst [vmem:[#allocation1] sm:%s3] %v4
    %v6 = vld [vmem:[#allocation1] sm:$0x1]
    %vm7 = vcmask 64512
    %8 = vst.msk [vmem:[#allocation0] sm:$0x1] %vm7, %v6
    %s9 = scalar_lea.vmem [#allocation1], 3
    %v10 = vld [vmem:[%s9] sm:$0x1]
    %11 = vrot.lane.b32.xlu0 %v10, 24
    %v12 = vpop.permute.xlu0 %11
    %vm13 = vcmask 261312
    %14 = vst.msk [vmem:[#allocation0] sm:$0x1] %vm13, %v12
    %s15 = scalar_lea.vmem [#allocation1], 2
    %v16 = vld [vmem:[%s15] sm:$0x1]
    %17 = vrot.lane.b32.xlu0 %v16, 16
    %v18 = vpop.permute.xlu0 %17
    %vm19 = vcmask 195712
    %20 = vst.msk [vmem:[#allocation0] sm:$0x1] %vm19, %v18
    %s21 = scalar_lea.vmem [#allocation1], 1
    %v22 = vld [vmem:[%s21] sm:$0x1]
    %23 = vrot.lane.b32.xlu0 %v22, 8
    %v24 = vpop.permute.xlu0 %23
    %vm25 = vcmask 130112
    %26 = vst.msk [vmem:[#allocation0] sm:$0x1] %vm25, %v24
    %s28 = ssub.s32 2, 1
    %v29 = vld [vmem:[#allocation0] sm:%s28]
    %s31 = ssub.s32 2, 1
    %32 = vst [vmem:[%s1] sm:%s31] %v29

// kernel: tile.18
$region0: #{tile.18}
  #allocation0 [shape = 's32[1]{0}', space=sflag, size = 0x4, scoped, tag = 'scoped memory for tile.18']
  %s0 = inlined_call_operand.vmem [shape: f32[8], index: 0, kind: input, shape index: {}]
  %s1 = inlined_call_operand.vmem [shape: f32[4,8], index: 1, kind: output, shape index: {}]
  // Predicated region
  $region2: #{tile.18} parent=0 // pred_check
    _
  $region3: #{tile.18} parent=0 // pred_check_branch
    %3 = sbr.rel (0) target = $region5
  $region4: #{tile.18} parent=0 // pred_region
    _
  $region5: #{tile.18} parent=0 // pred_fallthru
    _
  %v4 = vld [vmem:[%s0] ss:$0 sm:$0xff]
  %5 = vst [vmem:[%s1] sm:$0xf] %v4

// kernel: squeeze.2
$region0: #{squeeze.2}
  %s0 = inlined_call_operand.vmem [shape: f32[32], index: 0, kind: input, shape index: {}]
  %s1 = inlined_call_operand.vmem [shape: f32[4,8], index: 1, kind: output, shape index: {}]
  $region1: #{squeeze.2} parent=0
    #allocation0 [shape = 'u8[4096]{0}', space=vmem, size = 0x1000, scoped, tag = 'scoped mem for output reshape']
    #allocation1 [shape = 'u8[4096]{0}', space=vmem, size = 0x1000, scoped, tag = 'scoped mem for input reshape']
    %s3 = ssub.s32 2, 1
    %v4 = vld [vmem:[%s0] sm:%s3]
    %5 = vst [vmem:[#allocation1] sm:%s3] %v4
    %v6 = vld [vmem:[#allocation1] sm:$0x1]
    %vm7 = vcmask 64512
    %8 = vst.msk [vmem:[#allocation0] sm:$0x1] %vm7, %v6
    %v9 = vld [vmem:[#allocation1] sm:$0x1]
    %10 = vrot.lane.b32.xlu0 %v9, 120
    %v11 = vpop.permute.xlu0 %10
    %vm12 = vcmask 64512
    %s13 = scalar_lea.vmem [#allocation0], 1
    %14 = vst.msk [vmem:[%s13] sm:$0x1] %vm12, %v11
    %v15 = vld [vmem:[#allocation1] sm:$0x1]
    %16 = vrot.lane.b32.xlu0 %v15, 112
    %v17 = vpop.permute.xlu0 %16
    %vm18 = vcmask 64512
    %s19 = scalar_lea.vmem [#allocation0], 2
    %20 = vst.msk [vmem:[%s19] sm:$0x1] %vm18, %v17
    %v21 = vld [vmem:[#allocation1] sm:$0x1]
    %22 = vrot.lane.b32.xlu0 %v21, 104
    %v23 = vpop.permute.xlu0 %22
    %vm24 = vcmask 64512
    %s25 = scalar_lea.vmem [#allocation0], 3
    %26 = vst.msk [vmem:[%s25] sm:$0x1] %vm24, %v23
    %s28 = ssub.s32 16, 1
    %v29 = vld [vmem:[#allocation0] sm:%s28]
    %s31 = ssub.s32 16, 1
    %32 = vst [vmem:[%s1] sm:%s31] %v29

// kernel: upconv.3
$region0: #{upconv.3}
  #allocation0 [shape = 'u32[]', space=smem, size = 0x4, offset = 0x4, fixed_abs, tag = 'smem constant byte address 0x4 - core index']
  #allocation1 [shape = 'u32[72,128]{1,0:T(1,128)}', space=vmem, size = 0x9000, scoped, tag = 'internal scratch']
  %s0 = inlined_call_operand.vmem [shape: f32[32,16,32], index: 0, kind: input, shape index: {}, may-alias: {0,3}]
  %s1 = inlined_call_operand.vmem [shape: f32[1,32], index: 1, kind: input, shape index: {}]
  %s2 = inlined_call_operand.vmem [shape: f32[1,32], index: 2, kind: input, shape index: {}]
  %s3 = inlined_call_operand.vmem [shape: f32[32,16,32], index: 3, kind: output, shape index: {}, may-alias: {0,3}]
  %s4 = sld [smem:[#allocation0]]
  $region45: #{upconv.3} parent=0
    _
  %s6 = ssub.s32 1, %s4
  %s7 = scalar_select 0, %s6, %s4
  loop: start=0, step=1, limit=4
  $region2: #{upconv.3} parent=0 // loop_pre_header
    _
  $region3: #{upconv.3} parent=0 // loop_header
    %s9 = sphi 0, %s13
    %p10 = scmp.ge.s32.totalorder %s9, 4
    %s19 = sphi 0, %s21
    %s22 = sphi 0, %s19
    %s23 = sphi 0, %s22
    %s39 = sphi 0, %s23
    %s43 = sphi 0, %s43
    %s45 = sphi 0, %s43
    %s46 = sphi 0, %s45
    %s60 = sphi 0, %s46
    %s64 = sphi 0, %s64
    %s66 = sphi 0, %s64
    %s67 = sphi 0, %s66
    %s81 = sphi 0, %s67
    %s87 = sphi 0, %s89
    %s90 = sphi 0, %s87
    %s91 = sphi 0, %s90
    %s107 = sphi 0, %s91
  $region4: #{upconv.3} parent=0 // loop_header_branch
    %12 = sbr.rel (%p10) target = $region8
  $region5: #{upconv.3} parent=0 // loop_body
    %s14 = ssub.s32 %s9, 1
    %s15 = ssub.s32 %s9, 2
    %s16 = sadd.s32 %s9, 1
    %s17 = ssub.s32 %s9, %s16
    %p18 = scmp.eq.s32.totalorder %s17, 0
    %s20 = sadd.s32 %s19, 1
    %s21 = scalar_select %p18, %s19, %s20
    %p24 = pneg %p18
    %p25 = scmp.eq.s32.totalorder %s9, 1
    %p26 = por %p24, %p25
    %p27 = scmp.ne.s32.totalorder %s19, %s22
    %p28 = scmp.eq.s32.totalorder %s9, 0
    %p29 = por %p27, %p28
    %p30 = scmp.ne.s32.totalorder %s19, %s22
    %p31 = scmp.eq.s32.totalorder %s14, 1
    %p32 = por %p30, %p31
    %p33 = scmp.ne.s32.totalorder %s22, %s23
    %p34 = scmp.eq.s32.totalorder %s14, 0
    %p35 = por %p33, %p34
    %p36 = scmp.ne.s32.totalorder %s22, %s23
    %p37 = scmp.eq.s32.totalorder %s15, 1
    %p38 = por %p36, %p37
    %p40 = scmp.ne.s32.totalorder %s23, %s39
    %p41 = scmp.eq.s32.totalorder %s15, 0
    %p42 = por %p40, %p41
    %s44 = sadd.s32 %s43, 1
    %p47 = scmp.eq.s32.totalorder %s9, 1
    %p48 = scmp.ne.s32.totalorder %s43, %s45
    %p49 = scmp.eq.s32.totalorder %s9, 0
    %p50 = por %p48, %p49
    %p51 = scmp.ne.s32.totalorder %s43, %s45
    %p52 = scmp.eq.s32.totalorder %s14, 1
    %p53 = por %p51, %p52
    %p54 = scmp.ne.s32.totalorder %s45, %s46
    %p55 = scmp.eq.s32.totalorder %s14, 0
    %p56 = por %p54, %p55
    %p57 = scmp.ne.s32.totalorder %s45, %s46
    %p58 = scmp.eq.s32.totalorder %s15, 1
    %p59 = por %p57, %p58
    %p61 = scmp.ne.s32.totalorder %s46, %s60
    %p62 = scmp.eq.s32.totalorder %s15, 0
    %p63 = por %p61, %p62
    %s65 = sadd.s32 %s64, 1
    %p68 = scmp.eq.s32.totalorder %s9, 1
    %p69 = scmp.ne.s32.totalorder %s64, %s66
    %p70 = scmp.eq.s32.totalorder %s9, 0
    %p71 = por %p69, %p70
    %p72 = scmp.ne.s32.totalorder %s64, %s66
    %p73 = scmp.eq.s32.totalorder %s14, 1
    %p74 = por %p72, %p73
    %p75 = scmp.ne.s32.totalorder %s66, %s67
    %p76 = scmp.eq.s32.totalorder %s14, 0
    %p77 = por %p75, %p76
    %p78 = scmp.ne.s32.totalorder %s66, %s67
    %p79 = scmp.eq.s32.totalorder %s15, 1
    %p80 = por %p78, %p79
    %p82 = scmp.ne.s32.totalorder %s67, %s81
    %p83 = scmp.eq.s32.totalorder %s15, 0
    %p84 = por %p82, %p83
    %s85 = ssub.s32 %s9, %s16
    %p86 = scmp.eq.s32.totalorder %s85, 0
    %s88 = sadd.s32 %s87, 1
    %s89 = scalar_select %p86, %s87, %s88
    %p92 = pneg %p86
    %p93 = scmp.eq.s32.totalorder %s9, 1
    %p94 = por %p92, %p93
    %p95 = scmp.ne.s32.totalorder %s87, %s90
    %p96 = scmp.eq.s32.totalorder %s9, 0
    %p97 = por %p95, %p96
    %p98 = scmp.ne.s32.totalorder %s87, %s90
    %p99 = scmp.eq.s32.totalorder %s14, 1
    %p100 = por %p98, %p99
    %p101 = scmp.ne.s32.totalorder %s90, %s91
    %p102 = scmp.eq.s32.totalorder %s14, 0
    %p103 = por %p101, %p102
    %p104 = scmp.ne.s32.totalorder %s90, %s91
    %p105 = scmp.eq.s32.totalorder %s15, 1
    %p106 = por %p104, %p105
    %p108 = scmp.ne.s32.totalorder %s91, %s107
    %p109 = scmp.eq.s32.totalorder %s15, 0
    %p110 = por %p108, %p109
    %p111 = scmp.le.s32.totalorder 1, %s9
    %p112 = scmp.lt.s32.totalorder %s9, 3
    %p113 = pnand %p111, %p112
    %p114 = pneg %p113
    // Predicated region
    $region9: #{upconv.3} parent=5 // pred_check
      _
    $region10: #{upconv.3} parent=5 // pred_check_branch
      %116 = sbr.rel (%p113) target = $region12
    $region11: #{upconv.3} parent=5 // pred_region
      %s117 = ssub.s32 %s9, 1
      // Predicated region
      $region13: #{upconv.3} parent=11 // pred_check
        %p118 = pneg %p56
      $region14: #{upconv.3} parent=11 // pred_check_branch
        %120 = sbr.rel (%p118) target = $region16
      $region15: #{upconv.3} parent=11 // pred_region
        _
      $region16: #{upconv.3} parent=11 // pred_fallthru
        _
      // Predicated region
      $region17: #{upconv.3} parent=11 // pred_check
        %p121 = pneg %p77
      $region18: #{upconv.3} parent=11 // pred_check_branch
        %123 = sbr.rel (%p121) target = $region20
      $region19: #{upconv.3} parent=11 // pred_region
        _
      $region20: #{upconv.3} parent=11 // pred_fallthru
        _
    $region12: #{upconv.3} parent=5 // pred_fallthru
      _
    %p124 = scmp.lt.s32.totalorder %s9, 2
    // Predicated region
    $region21: #{upconv.3} parent=5 // pred_check
      %p125 = pneg %p124
    $region22: #{upconv.3} parent=5 // pred_check_branch
      %127 = sbr.rel (%p125) target = $region24
    $region23: #{upconv.3} parent=5 // pred_region
      // Predicated region
      $region25: #{upconv.3} parent=23 // pred_check
        %p128 = pneg %p29
      $region26: #{upconv.3} parent=23 // pred_check_branch
        %130 = sbr.rel (%p128) target = $region28
      $region27: #{upconv.3} parent=23 // pred_region
        %s131 = smul.u32 16, %s9
        %p132 = scmp.lt.s32.totalorder %s131, 31
        %s133 = scalar_select %p132, %s131, 31
        %s134 = smul.addr %s133, 2
        %s135 = smul.addr %s134, 8
        %s136 = scalar_lea.vmem %s0, %s135
        %s137 = smul.u32 16, %s9
      $region28: #{upconv.3} parent=23 // pred_fallthru
        _
    $region24: #{upconv.3} parent=5 // pred_fallthru
      _
    %p138 = scmp.le.s32.totalorder 1, %s9
    %p139 = scmp.lt.s32.totalorder %s9, 3
    %p140 = pnand %p138, %p139
    %p141 = pneg %p140
    // Predicated region
    $region29: #{upconv.3} parent=5 // pred_check
      _
    $region30: #{upconv.3} parent=5 // pred_check_branch
      %143 = sbr.rel (%p140) target = $region32
    $region31: #{upconv.3} parent=5 // pred_region
      %s144 = ssub.s32 %s9, 1
      %s145 = smul.u32 16, %s14
      %p146 = scmp.lt.s32.totalorder %s145, 31
      %s147 = scalar_select %p146, %s145, 31
      %s148 = smul.addr %s147, 2
      %s149 = smul.addr %s148, 8
      %s150 = scalar_lea.vmem %s0, %s149
      %p151 = pneg %p35
      %p152 = pneg %p32
      %p153 = pneg %p56
      %p154 = pneg %p53
      %p155 = pneg %p77
      %p156 = pneg %p74
      %p157 = pneg %p103
      %p158 = pneg %p100
      %s159 = smul.u32 16, %s14
      %p160 = scmp.lt.s32.totalorder %s159, 31
      %s161 = scalar_select %p160, %s159, 31
      %s162 = smul.addr %s161, 2
      %s163 = smul.addr %s162, 8
      %s164 = scalar_lea.vmem %s3, %s163
      %s165 = smul.u32 16, %s14
      %p166 = scmp.lt.s32.totalorder %s165, 31
      %s167 = scalar_select %p166, %s165, 31
      %s168 = smul.addr %s167, 2
      %s169 = smul.addr %s168, 8
      %s170 = scalar_lea.vmem %s0, %s169
      %s171 = smul.u32 16, %s14
      %s172 = smul.u32 16, %s14
      %p173 = scmp.lt.s32.totalorder %s172, 31
      %s174 = scalar_select %p173, %s172, 31
      %s175 = smul.addr %s174, 2
      %s176 = smul.addr %s175, 8
      %s177 = scalar_lea.vmem %s3, %s176
      %s178 = smul.u32 16, %s14
      %v179 = vld [vmem:[%s170] sm:$0xff]
      %v180 = vld [vmem:[%s170 + $0x8] sm:$0xff]
      %v181 = vld [vmem:[%s170 + $0x10] sm:$0xff]
      %v182 = vld [vmem:[%s170 + $0x18] sm:$0xff]
      %v183 = vld [vmem:[%s170 + $0x20] sm:$0xff]
      %v184 = vld [vmem:[%s170 + $0x28] sm:$0xff]
      %v185 = vld [vmem:[%s170 + $0x30] sm:$0xff]
      %v186 = vld [vmem:[%s170 + $0x38] sm:$0xff]
      %v187 = vld [vmem:[%s170 + $0x40] sm:$0xff]
      %v188 = vld [vmem:[%s170 + $0x48] sm:$0xff]
      %v189 = vld [vmem:[%s170 + $0x50] sm:$0xff]
      %v190 = vld [vmem:[%s170 + $0x58] sm:$0xff]
      %v191 = vld [vmem:[%s170 + $0x60] sm:$0xff]
      %v192 = vld [vmem:[%s170 + $0x68] sm:$0xff]
      %v193 = vld [vmem:[%s170 + $0x70] sm:$0xff]
      %v194 = vld [vmem:[%s170 + $0x78] sm:$0xff]
      %v195 = vld [vmem:[%s170 + $0x80] sm:$0xff]
      %v196 = vld [vmem:[%s170 + $0x88] sm:$0xff]
      %v197 = vld [vmem:[%s170 + $0x90] sm:$0xff]
      %v198 = vld [vmem:[%s170 + $0x98] sm:$0xff]
      %v199 = vld [vmem:[%s170 + $0xa0] sm:$0xff]
      %v200 = vld [vmem:[%s170 + $0xa8] sm:$0xff]
      %v201 = vld [vmem:[%s170 + $0xb0] sm:$0xff]
      %v202 = vld [vmem:[%s170 + $0xb8] sm:$0xff]
      %v203 = vld [vmem:[%s170 + $0xc0] sm:$0xff]
      %v204 = vld [vmem:[%s170 + $0xc8] sm:$0xff]
      %v205 = vld [vmem:[%s170 + $0xd0] sm:$0xff]
      %v206 = vld [vmem:[%s170 + $0xd8] sm:$0xff]
      %v207 = vld [vmem:[%s170 + $0xe0] sm:$0xff]
      %v208 = vld [vmem:[%s170 + $0xe8] sm:$0xff]
      %v209 = vld [vmem:[%s170 + $0xf0] sm:$0xff]
      %v210 = vld [vmem:[%s170 + $0xf8] sm:$0xff]
      %v211 = vld [vmem:[%s1] sm:$0x1]
      %v213 = vperm.slane %v211, 0
      %v215 = vmul.f32 %v179, %v213
      %v216 = vmul.f32 %v180, %v213
      %v217 = vmul.f32 %v181, %v213
      %v218 = vmul.f32 %v182, %v213
      %v219 = vmul.f32 %v183, %v213
      %v220 = vmul.f32 %v184, %v213
      %v221 = vmul.f32 %v185, %v213
      %v222 = vmul.f32 %v186, %v213
      %v223 = vmul.f32 %v187, %v213
      %v224 = vmul.f32 %v188, %v213
      %v225 = vmul.f32 %v189, %v213
      %v226 = vmul.f32 %v190, %v213
      %v227 = vmul.f32 %v191, %v213
      %v228 = vmul.f32 %v192, %v213
      %v229 = vmul.f32 %v193, %v213
      %v230 = vmul.f32 %v194, %v213
      %v231 = vmul.f32 %v195, %v213
      %v232 = vmul.f32 %v196, %v213
      %v233 = vmul.f32 %v197, %v213
      %v234 = vmul.f32 %v198, %v213
      %v235 = vmul.f32 %v199, %v213
      %v236 = vmul.f32 %v200, %v213
      %v237 = vmul.f32 %v201, %v213
      %v238 = vmul.f32 %v202, %v213
      %v239 = vmul.f32 %v203, %v213
      %v240 = vmul.f32 %v204, %v213
      %v241 = vmul.f32 %v205, %v213
      %v242 = vmul.f32 %v206, %v213
      %v243 = vmul.f32 %v207, %v213
      %v244 = vmul.f32 %v208, %v213
      %v245 = vmul.f32 %v209, %v213
      %v246 = vmul.f32 %v210, %v213
      %v247 = vld [vmem:[%s2] sm:$0x1]
      %v249 = vperm.slane %v247, 0
      %v251 = vadd.f32 %v215, %v249
      %v252 = vadd.f32 %v216, %v249
      %v253 = vadd.f32 %v217, %v249
      %v254 = vadd.f32 %v218, %v249
      %v255 = vadd.f32 %v219, %v249
      %v256 = vadd.f32 %v220, %v249
      %v257 = vadd.f32 %v221, %v249
      %v258 = vadd.f32 %v222, %v249
      %v259 = vadd.f32 %v223, %v249
      %v260 = vadd.f32 %v224, %v249
      %v261 = vadd.f32 %v225, %v249
      %v262 = vadd.f32 %v226, %v249
      %v263 = vadd.f32 %v227, %v249
      %v264 = vadd.f32 %v228, %v249
      %v265 = vadd.f32 %v229, %v249
      %v266 = vadd.f32 %v230, %v249
      %v267 = vadd.f32 %v231, %v249
      %v268 = vadd.f32 %v232, %v249
      %v269 = vadd.f32 %v233, %v249
      %v270 = vadd.f32 %v234, %v249
      %v271 = vadd.f32 %v235, %v249
      %v272 = vadd.f32 %v236, %v249
      %v273 = vadd.f32 %v237, %v249
      %v274 = vadd.f32 %v238, %v249
      %v275 = vadd.f32 %v239, %v249
      %v276 = vadd.f32 %v240, %v249
      %v277 = vadd.f32 %v241, %v249
      %v278 = vadd.f32 %v242, %v249
      %v279 = vadd.f32 %v243, %v249
      %v280 = vadd.f32 %v244, %v249
      %v281 = vadd.f32 %v245, %v249
      %v282 = vadd.f32 %v246, %v249
      %v283 = vmax.f32 %v251, 0.0
      %v284 = vmax.f32 %v252, 0.0
      %v285 = vmax.f32 %v253, 0.0
      %v286 = vmax.f32 %v254, 0.0
      %v287 = vmax.f32 %v255, 0.0
      %v288 = vmax.f32 %v256, 0.0
      %v289 = vmax.f32 %v257, 0.0
      %v290 = vmax.f32 %v258, 0.0
      %v291 = vmax.f32 %v259, 0.0
      %v292 = vmax.f32 %v260, 0.0
      %v293 = vmax.f32 %v261, 0.0
      %v294 = vmax.f32 %v262, 0.0
      %v295 = vmax.f32 %v263, 0.0
      %v296 = vmax.f32 %v264, 0.0
      %v297 = vmax.f32 %v265, 0.0
      %v298 = vmax.f32 %v266, 0.0
      %v299 = vmax.f32 %v267, 0.0
      %v300 = vmax.f32 %v268, 0.0
      %v301 = vmax.f32 %v269, 0.0
      %v302 = vmax.f32 %v270, 0.0
      %v303 = vmax.f32 %v271, 0.0
      %v304 = vmax.f32 %v272, 0.0
      %v305 = vmax.f32 %v273, 0.0
      %v306 = vmax.f32 %v274, 0.0
      %v307 = vmax.f32 %v275, 0.0
      %v308 = vmax.f32 %v276, 0.0
      %v309 = vmax.f32 %v277, 0.0
      %v310 = vmax.f32 %v278, 0.0
      %v311 = vmax.f32 %v279, 0.0
      %v312 = vmax.f32 %v280, 0.0
      %v313 = vmax.f32 %v281, 0.0
      %v314 = vmax.f32 %v282, 0.0
      %vm315 = vcmask 261120
      %316 = vst.msk [vmem:[%s177] sm:$0xff] %vm315, %v283
      %317 = vst.msk [vmem:[%s177 + $0x8] sm:$0xff] %vm315, %v284
      %318 = vst.msk [vmem:[%s177 + $0x10] sm:$0xff] %vm315, %v285
      %319 = vst.msk [vmem:[%s177 + $0x18] sm:$0xff] %vm315, %v286
      %320 = vst.msk [vmem:[%s177 + $0x20] sm:$0xff] %vm315, %v287
      %321 = vst.msk [vmem:[%s177 + $0x28] sm:$0xff] %vm315, %v288
      %322 = vst.msk [vmem:[%s177 + $0x30] sm:$0xff] %vm315, %v289
      %323 = vst.msk [vmem:[%s177 + $0x38] sm:$0xff] %vm315, %v290
      %324 = vst.msk [vmem:[%s177 + $0x40] sm:$0xff] %vm315, %v291
      %325 = vst.msk [vmem:[%s177 + $0x48] sm:$0xff] %vm315, %v292
      %326 = vst.msk [vmem:[%s177 + $0x50] sm:$0xff] %vm315, %v293
      %327 = vst.msk [vmem:[%s177 + $0x58] sm:$0xff] %vm315, %v294
      %328 = vst.msk [vmem:[%s177 + $0x60] sm:$0xff] %vm315, %v295
      %329 = vst.msk [vmem:[%s177 + $0x68] sm:$0xff] %vm315, %v296
      %330 = vst.msk [vmem:[%s177 + $0x70] sm:$0xff] %vm315, %v297
      %331 = vst.msk [vmem:[%s177 + $0x78] sm:$0xff] %vm315, %v298
      %332 = vst.msk [vmem:[%s177 + $0x80] sm:$0xff] %vm315, %v299
      %333 = vst.msk [vmem:[%s177 + $0x88] sm:$0xff] %vm315, %v300
      %334 = vst.msk [vmem:[%s177 + $0x90] sm:$0xff] %vm315, %v301
      %335 = vst.msk [vmem:[%s177 + $0x98] sm:$0xff] %vm315, %v302
      %336 = vst.msk [vmem:[%s177 + $0xa0] sm:$0xff] %vm315, %v303
      %337 = vst.msk [vmem:[%s177 + $0xa8] sm:$0xff] %vm315, %v304
      %338 = vst.msk [vmem:[%s177 + $0xb0] sm:$0xff] %vm315, %v305
      %339 = vst.msk [vmem:[%s177 + $0xb8] sm:$0xff] %vm315, %v306
      %340 = vst.msk [vmem:[%s177 + $0xc0] sm:$0xff] %vm315, %v307
      %341 = vst.msk [vmem:[%s177 + $0xc8] sm:$0xff] %vm315, %v308
      %342 = vst.msk [vmem:[%s177 + $0xd0] sm:$0xff] %vm315, %v309
      %343 = vst.msk [vmem:[%s177 + $0xd8] sm:$0xff] %vm315, %v310
      %344 = vst.msk [vmem:[%s177 + $0xe0] sm:$0xff] %vm315, %v311
      %345 = vst.msk [vmem:[%s177 + $0xe8] sm:$0xff] %vm315, %v312
      %346 = vst.msk [vmem:[%s177 + $0xf0] sm:$0xff] %vm315, %v313
      %347 = vst.msk [vmem:[%s177 + $0xf8] sm:$0xff] %vm315, %v314
      %s348 = smul.u32 16, %s14
      %p349 = scmp.lt.s32.totalorder %s348, 31
      %s350 = scalar_select %p349, %s348, 31
      %s351 = smul.addr %s350, 2
      %s352 = smul.addr %s351, 8
      %s353 = scalar_lea.vmem %s3, %s352
      // Predicated region
      $region33: #{upconv.3} parent=31 // pred_check
        %p354 = pneg %p100
      $region34: #{upconv.3} parent=31 // pred_check_branch
        %356 = sbr.rel (%p354) target = $region36
      $region35: #{upconv.3} parent=31 // pred_region
        %s357 = smul.u32 16, %s14
      $region36: #{upconv.3} parent=31 // pred_fallthru
        _
    $region32: #{upconv.3} parent=5 // pred_fallthru
      _
    %p358 = scmp.le.s32.totalorder 2, %s9
    // Predicated region
    $region37: #{upconv.3} parent=5 // pred_check
      %p359 = pneg %p358
    $region38: #{upconv.3} parent=5 // pred_check_branch
      %361 = sbr.rel (%p359) target = $region40
    $region39: #{upconv.3} parent=5 // pred_region
      %s362 = ssub.s32 %s9, 2
      // Predicated region
      $region41: #{upconv.3} parent=39 // pred_check
        %p363 = pneg %p106
      $region42: #{upconv.3} parent=39 // pred_check_branch
        %365 = sbr.rel (%p363) target = $region44
      $region43: #{upconv.3} parent=39 // pred_region
        %s366 = smul.u32 16, %s15
        %p367 = scmp.lt.s32.totalorder %s366, 31
        %s368 = scalar_select %p367, %s366, 31
        %s369 = smul.addr %s368, 2
        %s370 = smul.addr %s369, 8
        %s371 = scalar_lea.vmem %s3, %s370
      $region44: #{upconv.3} parent=39 // pred_fallthru
        _
    $region40: #{upconv.3} parent=5 // pred_fallthru
      _
  $region6: #{upconv.3} parent=0 // loop_footer
    %s13 = sadd.s32 1, %s9
  $region7: #{upconv.3} parent=0 // loop_footer_branch
    %8 = sbr.rel target = $region3
  $region8: #{upconv.3} parent=0 // loop_exit
    _

// kernel: upconv.2
$region0: #{upconv.2}
  #allocation0 [shape = 'u32[]', space=smem, size = 0x4, offset = 0x4, fixed_abs, tag = 'smem constant byte address 0x4 - core index']
  #allocation1 [shape = 'u32[72,128]{1,0:T(1,128)}', space=vmem, size = 0x9000, scoped, tag = 'internal scratch']
  %s0 = inlined_call_operand.vmem [shape: f32[2,18,18,4], index: 0, kind: input, shape index: {}]
  %s1 = inlined_call_operand.vmem [shape: f32[36,32], index: 1, kind: input, shape index: {}]
  %s2 = inlined_call_operand.vmem [shape: f32[1,32], index: 2, kind: input, shape index: {}]
  %s3 = inlined_call_operand.vmem [shape: f32[32,16,32], index: 3, kind: output, shape index: {0}]
  %s4 = inlined_call_operand.vmem [shape: f32[2,2,32], index: 4, kind: output, shape index: {1}]
  %5 = xla_tuple %s3, %s4
  %s6 = sld [smem:[#allocation0]]
  $region53: #{upconv.2} parent=0
    _
  %s8 = ssub.s32 1, %s6
  %s9 = scalar_select 0, %s8, %s6
  loop: start=0, step=1, limit=4
  $region2: #{upconv.2} parent=0 // loop_pre_header
    _
  $region3: #{upconv.2} parent=0 // loop_header
    %s11 = sphi 0, %s15
    %p12 = scmp.ge.s32.totalorder %s11, 4
    %s18 = sphi 0, %s30
    %s19 = sphi 0, %s26
    %s20 = sphi 0, %s18
    %s21 = sphi 0, %s19
    %s22 = sphi 0, %s20
    %s23 = sphi 0, %s21
    %s33 = sphi 0, %s35
    %s36 = sphi 0, %s33
    %s37 = sphi 0, %s36
    %s53 = sphi 0, %s37
    %s57 = sphi 0, %s57
    %s59 = sphi 0, %s57
    %s60 = sphi 0, %s59
    %s74 = sphi 0, %s60
    %s78 = sphi 0, %s78
    %s80 = sphi 0, %s78
    %s81 = sphi 0, %s80
    %s95 = sphi 0, %s81
    %s103 = sphi 0, %s105
    %s106 = sphi 0, %s103
    %s107 = sphi 0, %s106
    %s123 = sphi 0, %s107
    %s131 = sphi 0, %s133
    %s134 = sphi 0, %s131
    %s135 = sphi 0, %s134
    %s151 = sphi 0, %s135
  $region4: #{upconv.2} parent=0 // loop_header_branch
    %14 = sbr.rel (%p12) target = $region8
  $region5: #{upconv.2} parent=0 // loop_body
    %s16 = ssub.s32 %s11, 1
    %s17 = ssub.s32 %s11, 2
    %s24 = sadd.s32 1, %s19
    %p25 = scmp.ge.s32.totalorder %s24, 1
    %s26 = scalar_select %p25, 0, %s24
    %s27 = sadd.s32 1, %s18
    %s28 = scalar_select %p25, %s27, %s18
    %p29 = scmp.ge.s32.totalorder %s28, 2
    %s30 = scalar_select %p29, 0, %s28
    %s31 = ssub.s32 %s18, %s30
    %p32 = scmp.eq.s32.totalorder %s31, 0
    %s34 = sadd.s32 %s33, 1
    %s35 = scalar_select %p32, %s33, %s34
    %p38 = pneg %p32
    %p39 = scmp.eq.s32.totalorder %s11, 1
    %p40 = por %p38, %p39
    %p41 = scmp.ne.s32.totalorder %s33, %s36
    %p42 = scmp.eq.s32.totalorder %s11, 0
    %p43 = por %p41, %p42
    %p44 = scmp.ne.s32.totalorder %s33, %s36
    %p45 = scmp.eq.s32.totalorder %s16, 1
    %p46 = por %p44, %p45
    %p47 = scmp.ne.s32.totalorder %s36, %s37
    %p48 = scmp.eq.s32.totalorder %s16, 0
    %p49 = por %p47, %p48
    %p50 = scmp.ne.s32.totalorder %s36, %s37
    %p51 = scmp.eq.s32.totalorder %s17, 1
    %p52 = por %p50, %p51
    %p54 = scmp.ne.s32.totalorder %s37, %s53
    %p55 = scmp.eq.s32.totalorder %s17, 0
    %p56 = por %p54, %p55
    %s58 = sadd.s32 %s57, 1
    %p61 = scmp.eq.s32.totalorder %s11, 1
    %p62 = scmp.ne.s32.totalorder %s57, %s59
    %p63 = scmp.eq.s32.totalorder %s11, 0
    %p64 = por %p62, %p63
    %p65 = scmp.ne.s32.totalorder %s57, %s59
    %p66 = scmp.eq.s32.totalorder %s16, 1
    %p67 = por %p65, %p66
    %p68 = scmp.ne.s32.totalorder %s59, %s60
    %p69 = scmp.eq.s32.totalorder %s16, 0
    %p70 = por %p68, %p69
    %p71 = scmp.ne.s32.totalorder %s59, %s60
    %p72 = scmp.eq.s32.totalorder %s17, 1
    %p73 = por %p71, %p72
    %p75 = scmp.ne.s32.totalorder %s60, %s74
    %p76 = scmp.eq.s32.totalorder %s17, 0
    %p77 = por %p75, %p76
    %s79 = sadd.s32 %s78, 1
    %p82 = scmp.eq.s32.totalorder %s11, 1
    %p83 = scmp.ne.s32.totalorder %s78, %s80
    %p84 = scmp.eq.s32.totalorder %s11, 0
    %p85 = por %p83, %p84
    %p86 = scmp.ne.s32.totalorder %s78, %s80
    %p87 = scmp.eq.s32.totalorder %s16, 1
    %p88 = por %p86, %p87
    %p89 = scmp.ne.s32.totalorder %s80, %s81
    %p90 = scmp.eq.s32.totalorder %s16, 0
    %p91 = por %p89, %p90
    %p92 = scmp.ne.s32.totalorder %s80, %s81
    %p93 = scmp.eq.s32.totalorder %s17, 1
    %p94 = por %p92, %p93
    %p96 = scmp.ne.s32.totalorder %s81, %s95
    %p97 = scmp.eq.s32.totalorder %s17, 0
    %p98 = por %p96, %p97
    %s99 = sadd.s32 %s18, %s19
    %s100 = sadd.s32 %s30, %s26
    %s101 = ssub.s32 %s99, %s100
    %p102 = scmp.eq.s32.totalorder %s101, 0
    %s104 = sadd.s32 %s103, 1
    %s105 = scalar_select %p102, %s103, %s104
    %p108 = pneg %p102
    %p109 = scmp.eq.s32.totalorder %s11, 1
    %p110 = por %p108, %p109
    %p111 = scmp.ne.s32.totalorder %s103, %s106
    %p112 = scmp.eq.s32.totalorder %s11, 0
    %p113 = por %p111, %p112
    %p114 = scmp.ne.s32.totalorder %s103, %s106
    %p115 = scmp.eq.s32.totalorder %s16, 1
    %p116 = por %p114, %p115
    %p117 = scmp.ne.s32.totalorder %s106, %s107
    %p118 = scmp.eq.s32.totalorder %s16, 0
    %p119 = por %p117, %p118
    %p120 = scmp.ne.s32.totalorder %s106, %s107
    %p121 = scmp.eq.s32.totalorder %s17, 1
    %p122 = por %p120, %p121
    %p124 = scmp.ne.s32.totalorder %s107, %s123
    %p125 = scmp.eq.s32.totalorder %s17, 0
    %p126 = por %p124, %p125
    %s127 = sadd.s32 %s18, %s19
    %s128 = sadd.s32 %s30, %s26
    %s129 = ssub.s32 %s127, %s128
    %p130 = scmp.eq.s32.totalorder %s129, 0
    %s132 = sadd.s32 %s131, 1
    %s133 = scalar_select %p130, %s131, %s132
    %p136 = pneg %p130
    %p137 = scmp.eq.s32.totalorder %s11, 1
    %p138 = por %p136, %p137
    %p139 = scmp.ne.s32.totalorder %s131, %s134
    %p140 = scmp.eq.s32.totalorder %s11, 0
    %p141 = por %p139, %p140
    %p142 = scmp.ne.s32.totalorder %s131, %s134
    %p143 = scmp.eq.s32.totalorder %s16, 1
    %p144 = por %p142, %p143
    %p145 = scmp.ne.s32.totalorder %s134, %s135
    %p146 = scmp.eq.s32.totalorder %s16, 0
    %p147 = por %p145, %p146
    %p148 = scmp.ne.s32.totalorder %s134, %s135
    %p149 = scmp.eq.s32.totalorder %s17, 1
    %p150 = por %p148, %p149
    %p152 = scmp.ne.s32.totalorder %s135, %s151
    %p153 = scmp.eq.s32.totalorder %s17, 0
    %p154 = por %p152, %p153
    %p155 = scmp.le.s32.totalorder 1, %s11
    %p156 = scmp.lt.s32.totalorder %s11, 3
    %p157 = pnand %p155, %p156
    %p158 = pneg %p157
    // Predicated region
    $region9: #{upconv.2} parent=5 // pred_check
      _
    $region10: #{upconv.2} parent=5 // pred_check_branch
      %160 = sbr.rel (%p157) target = $region12
    $region11: #{upconv.2} parent=5 // pred_region
      %s161 = ssub.s32 %s11, 1
      // Predicated region
      $region13: #{upconv.2} parent=11 // pred_check
        %p162 = pneg %p70
      $region14: #{upconv.2} parent=11 // pred_check_branch
        %164 = sbr.rel (%p162) target = $region16
      $region15: #{upconv.2} parent=11 // pred_region
        _
      $region16: #{upconv.2} parent=11 // pred_fallthru
        _
      // Predicated region
      $region17: #{upconv.2} parent=11 // pred_check
        %p165 = pneg %p91
      $region18: #{upconv.2} parent=11 // pred_check_branch
        %167 = sbr.rel (%p165) target = $region20
      $region19: #{upconv.2} parent=11 // pred_region
        _
      $region20: #{upconv.2} parent=11 // pred_fallthru
        _
    $region12: #{upconv.2} parent=5 // pred_fallthru
      _
    %p168 = scmp.lt.s32.totalorder %s11, 2
    // Predicated region
    $region21: #{upconv.2} parent=5 // pred_check
      %p169 = pneg %p168
    $region22: #{upconv.2} parent=5 // pred_check_branch
      %171 = sbr.rel (%p169) target = $region24
    $region23: #{upconv.2} parent=5 // pred_region
      // Predicated region
      $region25: #{upconv.2} parent=23 // pred_check
        %p172 = pneg %p43
      $region26: #{upconv.2} parent=23 // pred_check_branch
        %174 = sbr.rel (%p172) target = $region28
      $region27: #{upconv.2} parent=23 // pred_region
        %p175 = scmp.lt.s32.totalorder %s18, 1
        %s176 = scalar_select %p175, %s18, 1
        %s177 = smul.addr %s176, 54
        %s178 = smul.addr %s177, 8
        %s179 = scalar_lea.vmem %s0, %s178
      $region28: #{upconv.2} parent=23 // pred_fallthru
        _
    $region24: #{upconv.2} parent=5 // pred_fallthru
      _
    %p180 = scmp.le.s32.totalorder 1, %s11
    %p181 = scmp.lt.s32.totalorder %s11, 3
    %p182 = pnand %p180, %p181
    %p183 = pneg %p182
    // Predicated region
    $region29: #{upconv.2} parent=5 // pred_check
      _
    $region30: #{upconv.2} parent=5 // pred_check_branch
      %185 = sbr.rel (%p182) target = $region32
    $region31: #{upconv.2} parent=5 // pred_region
      %s186 = ssub.s32 %s11, 1
      %p187 = scmp.lt.s32.totalorder %s20, 1
      %s188 = scalar_select %p187, %s20, 1
      %s189 = smul.addr %s188, 54
      %s190 = smul.addr %s189, 8
      %s191 = scalar_lea.vmem %s0, %s190
      %p192 = pneg %p49
      %p193 = pneg %p46
      %p194 = pneg %p70
      %p195 = pneg %p67
      %p196 = pneg %p91
      %p197 = pneg %p88
      %p198 = pneg %p119
      %p199 = pneg %p116
      %s200 = sadd.s32 %s20, %s21
      %s201 = smul.u32 16, %s200
      %p202 = scmp.lt.s32.totalorder %s201, 31
      %s203 = scalar_select %p202, %s201, 31
      %s204 = smul.addr %s203, 2
      %s205 = smul.addr %s204, 8
      %s206 = scalar_lea.vmem %s3, %s205
      %p207 = pneg %p147
      %p208 = pneg %p144
      %s209 = sadd.s32 %s20, %s21
      %p210 = scmp.lt.s32.totalorder %s209, 1
      %s211 = scalar_select %p210, %s209, 1
      %s212 = smul.addr %s211, 2
      %s213 = scalar_lea.vmem %s4, %s212
      %p214 = scmp.lt.s32.totalorder %s20, 1
      %s215 = scalar_select %p214, %s20, 1
      %s216 = smul.addr %s215, 54
      %s217 = smul.addr %s216, 8
      %s218 = scalar_lea.vmem %s0, %s217
      %s219 = sadd.s32 %s20, %s21
      %s220 = smul.u32 16, %s219
      %p221 = scmp.lt.s32.totalorder %s220, 31
      %s222 = scalar_select %p221, %s220, 31
      %s223 = smul.addr %s222, 2
      %s224 = smul.addr %s223, 8
      %s225 = scalar_lea.vmem %s3, %s224
      %s226 = sadd.s32 %s20, %s21
      %s227 = smul.u32 16, %s226
      %s228 = sadd.s32 %s20, %s21
      %p229 = scmp.lt.s32.totalorder %s228, 1
      %s230 = scalar_select %p229, %s228, 1
      %s231 = smul.addr %s230, 2
      %s232 = scalar_lea.vmem %s4, %s231
      %s233 = sadd.s32 %s20, %s21
      %s234 = smul.u32 %s21, 16
      %s235 = smul.u32 %s234, 24
      %s236 = scalar_lea.vmem %s218, %s235
      %v237 = vld [vmem:[%s236] sm:$0xff]
      %v238 = vld [vmem:[%s236 + $0x8] sm:$0xff]
      %v239 = vld [vmem:[%s236 + $0x10] sm:$0x3]
      %v240 = vld [vmem:[%s236 + $0x18] sm:$0xff]
      %v241 = vld [vmem:[%s236 + $0x20] sm:$0xff]
      %v242 = vld [vmem:[%s236 + $0x28] sm:$0x3]
      %v243 = vld [vmem:[%s236 + $0x30] sm:$0xff]
      %v244 = vld [vmem:[%s236 + $0x38] sm:$0xff]
      %v245 = vld [vmem:[%s236 + $0x40] sm:$0x3]
      %v246 = vld [vmem:[%s236 + $0x48] sm:$0xff]
      %v247 = vld [vmem:[%s236 + $0x50] sm:$0xff]
      %v248 = vld [vmem:[%s236 + $0x58] sm:$0x3]
      %v249 = vld [vmem:[%s236 + $0x60] sm:$0xff]
      %v250 = vld [vmem:[%s236 + $0x68] sm:$0xff]
      %v251 = vld [vmem:[%s236 + $0x70] sm:$0x3]
      %v252 = vld [vmem:[%s236 + $0x78] sm:$0xff]
      %v253 = vld [vmem:[%s236 + $0x80] sm:$0xff]
      %v254 = vld [vmem:[%s236 + $0x88] sm:$0x3]
      %v255 = vld [vmem:[%s236 + $0x90] sm:$0xff]
      %v256 = vld [vmem:[%s236 + $0x98] sm:$0xff]
      %v257 = vld [vmem:[%s236 + $0xa0] sm:$0x3]
      %v258 = vld [vmem:[%s236 + $0xa8] sm:$0xff]
      %v259 = vld [vmem:[%s236 + $0xb0] sm:$0xff]
      %v260 = vld [vmem:[%s236 + $0xb8] sm:$0x3]
      %v261 = vld [vmem:[%s236 + $0xc0] sm:$0xff]
      %v262 = vld [vmem:[%s236 + $0xc8] sm:$0xff]
      %v263 = vld [vmem:[%s236 + $0xd0] sm:$0x3]
      %v264 = vld [vmem:[%s236 + $0xd8] sm:$0xff]
      %v265 = vld [vmem:[%s236 + $0xe0] sm:$0xff]
      %v266 = vld [vmem:[%s236 + $0xe8] sm:$0x3]
      %v267 = vld [vmem:[%s236 + $0xf0] sm:$0xff]
      %v268 = vld [vmem:[%s236 + $0xf8] sm:$0xff]
      %v269 = vld [vmem:[%s236 + $0x100] sm:$0x3]
      %v270 = vld [vmem:[%s236 + $0x108] sm:$0xff]
      %v271 = vld [vmem:[%s236 + $0x110] sm:$0xff]
      %v272 = vld [vmem:[%s236 + $0x118] sm:$0x3]
      %v273 = vld [vmem:[%s236 + $0x120] sm:$0xff]
      %v274 = vld [vmem:[%s236 + $0x128] sm:$0xff]
      %v275 = vld [vmem:[%s236 + $0x130] sm:$0x3]
      %v276 = vld [vmem:[%s236 + $0x138] sm:$0xff]
      %v277 = vld [vmem:[%s236 + $0x140] sm:$0xff]
      %v278 = vld [vmem:[%s236 + $0x148] sm:$0x3]
      %v279 = vld [vmem:[%s236 + $0x150] sm:$0xff]
      %v280 = vld [vmem:[%s236 + $0x158] sm:$0xff]
      %v281 = vld [vmem:[%s236 + $0x160] sm:$0x3]
      %v282 = vld [vmem:[%s236 + $0x168] sm:$0xff]
      %v283 = vld [vmem:[%s236 + $0x170] sm:$0xff]
      %v284 = vld [vmem:[%s236 + $0x178] sm:$0x3]
      %v285 = vld [vmem:[%s236 + $0x180] sm:$0xff]
      %v286 = vld [vmem:[%s236 + $0x188] sm:$0xff]
      %v287 = vld [vmem:[%s236 + $0x190] sm:$0x3]
      %v288 = vld [vmem:[%s236 + $0x198] sm:$0xff]
      %v289 = vld [vmem:[%s236 + $0x1a0] sm:$0xff]
      %v290 = vld [vmem:[%s236 + $0x1a8] sm:$0x3]
      %vm339 = vcmask 1046528
      %v340 = vrot.slane %v237, 1
      %v341 = vrot.slane %v238, 1
      %v342 = vsel %vm339, %v340, %v341
      %v343 = vrot.slane %v239, 1
      %v344 = vsel %vm339, %v341, %v343
      %v345 = vrot.slane %v240, 1
      %v346 = vrot.slane %v241, 1
      %v347 = vsel %vm339, %v345, %v346
      %v348 = vrot.slane %v242, 1
      %v349 = vsel %vm339, %v346, %v348
      %v350 = vrot.slane %v243, 1
      %v351 = vrot.slane %v244, 1
      %v352 = vsel %vm339, %v350, %v351
      %v353 = vrot.slane %v245, 1
      %v354 = vsel %vm339, %v351, %v353
      %v355 = vrot.slane %v246, 1
      %v356 = vrot.slane %v247, 1
      %v357 = vsel %vm339, %v355, %v356
      %v358 = vrot.slane %v248, 1
      %v359 = vsel %vm339, %v356, %v358
      %v360 = vrot.slane %v249, 1
      %v361 = vrot.slane %v250, 1
      %v362 = vsel %vm339, %v360, %v361
      %v363 = vrot.slane %v251, 1
      %v364 = vsel %vm339, %v361, %v363
      %v365 = vrot.slane %v252, 1
      %v366 = vrot.slane %v253, 1
      %v367 = vsel %vm339, %v365, %v366
      %v368 = vrot.slane %v254, 1
      %v369 = vsel %vm339, %v366, %v368
      %v370 = vrot.slane %v255, 1
      %v371 = vrot.slane %v256, 1
      %v372 = vsel %vm339, %v370, %v371
      %v373 = vrot.slane %v257, 1
      %v374 = vsel %vm339, %v371, %v373
      %v375 = vrot.slane %v258, 1
      %v376 = vrot.slane %v259, 1
      %v377 = vsel %vm339, %v375, %v376
      %v378 = vrot.slane %v260, 1
      %v379 = vsel %vm339, %v376, %v378
      %v380 = vrot.slane %v261, 1
      %v381 = vrot.slane %v262, 1
      %v382 = vsel %vm339, %v380, %v381
      %v383 = vrot.slane %v263, 1
      %v384 = vsel %vm339, %v381, %v383
      %v385 = vrot.slane %v264, 1
      %v386 = vrot.slane %v265, 1
      %v387 = vsel %vm339, %v385, %v386
      %v388 = vrot.slane %v266, 1
      %v389 = vsel %vm339, %v386, %v388
      %v390 = vrot.slane %v267, 1
      %v391 = vrot.slane %v268, 1
      %v392 = vsel %vm339, %v390, %v391
      %v393 = vrot.slane %v269, 1
      %v394 = vsel %vm339, %v391, %v393
      %v395 = vrot.slane %v270, 1
      %v396 = vrot.slane %v271, 1
      %v397 = vsel %vm339, %v395, %v396
      %v398 = vrot.slane %v272, 1
      %v399 = vsel %vm339, %v396, %v398
      %v400 = vrot.slane %v273, 1
      %v401 = vrot.slane %v274, 1
      %v402 = vsel %vm339, %v400, %v401
      %v403 = vrot.slane %v275, 1
      %v404 = vsel %vm339, %v401, %v403
      %v405 = vrot.slane %v276, 1
      %v406 = vrot.slane %v277, 1
      %v407 = vsel %vm339, %v405, %v406
      %v408 = vrot.slane %v278, 1
      %v409 = vsel %vm339, %v406, %v408
      %v410 = vrot.slane %v279, 1
      %v411 = vrot.slane %v280, 1
      %v412 = vsel %vm339, %v410, %v411
      %v413 = vrot.slane %v281, 1
      %v414 = vsel %vm339, %v411, %v413
      %v415 = vrot.slane %v282, 1
      %v416 = vrot.slane %v283, 1
      %v417 = vsel %vm339, %v415, %v416
      %v418 = vrot.slane %v284, 1
      %v419 = vsel %vm339, %v416, %v418
      %vm420 = vcmask 1045504
      %v421 = vrot.slane %v237, 2
      %v422 = vrot.slane %v238, 2
      %v423 = vsel %vm420, %v421, %v422
      %v424 = vrot.slane %v239, 2
      %v425 = vsel %vm420, %v422, %v424
      %v426 = vrot.slane %v240, 2
      %v427 = vrot.slane %v241, 2
      %v428 = vsel %vm420, %v426, %v427
      %v429 = vrot.slane %v242, 2
      %v430 = vsel %vm420, %v427, %v429
      %v431 = vrot.slane %v243, 2
      %v432 = vrot.slane %v244, 2
      %v433 = vsel %vm420, %v431, %v432
      %v434 = vrot.slane %v245, 2
      %v435 = vsel %vm420, %v432, %v434
      %v436 = vrot.slane %v246, 2
      %v437 = vrot.slane %v247, 2
      %v438 = vsel %vm420, %v436, %v437
      %v439 = vrot.slane %v248, 2
      %v440 = vsel %vm420, %v437, %v439
      %v441 = vrot.slane %v249, 2
      %v442 = vrot.slane %v250, 2
      %v443 = vsel %vm420, %v441, %v442
      %v444 = vrot.slane %v251, 2
      %v445 = vsel %vm420, %v442, %v444
      %v446 = vrot.slane %v252, 2
      %v447 = vrot.slane %v253, 2
      %v448 = vsel %vm420, %v446, %v447
      %v449 = vrot.slane %v254, 2
      %v450 = vsel %vm420, %v447, %v449
      %v451 = vrot.slane %v255, 2
      %v452 = vrot.slane %v256, 2
      %v453 = vsel %vm420, %v451, %v452
      %v454 = vrot.slane %v257, 2
      %v455 = vsel %vm420, %v452, %v454
      %v456 = vrot.slane %v258, 2
      %v457 = vrot.slane %v259, 2
      %v458 = vsel %vm420, %v456, %v457
      %v459 = vrot.slane %v260, 2
      %v460 = vsel %vm420, %v457, %v459
      %v461 = vrot.slane %v261, 2
      %v462 = vrot.slane %v262, 2
      %v463 = vsel %vm420, %v461, %v462
      %v464 = vrot.slane %v263, 2
      %v465 = vsel %vm420, %v462, %v464
      %v466 = vrot.slane %v264, 2
      %v467 = vrot.slane %v265, 2
      %v468 = vsel %vm420, %v466, %v467
      %v469 = vrot.slane %v266, 2
      %v470 = vsel %vm420, %v467, %v469
      %v471 = vrot.slane %v267, 2
      %v472 = vrot.slane %v268, 2
      %v473 = vsel %vm420, %v471, %v472
      %v474 = vrot.slane %v269, 2
      %v475 = vsel %vm420, %v472, %v474
      %v476 = vrot.slane %v270, 2
      %v477 = vrot.slane %v271, 2
      %v478 = vsel %vm420, %v476, %v477
      %v479 = vrot.slane %v272, 2
      %v480 = vsel %vm420, %v477, %v479
      %v481 = vrot.slane %v273, 2
      %v482 = vrot.slane %v274, 2
      %v483 = vsel %vm420, %v481, %v482
      %v484 = vrot.slane %v275, 2
      %v485 = vsel %vm420, %v482, %v484
      %v486 = vrot.slane %v276, 2
      %v487 = vrot.slane %v277, 2
      %v488 = vsel %vm420, %v486, %v487
      %v489 = vrot.slane %v278, 2
      %v490 = vsel %vm420, %v487, %v489
      %v491 = vrot.slane %v279, 2
      %v492 = vrot.slane %v280, 2
      %v493 = vsel %vm420, %v491, %v492
      %v494 = vrot.slane %v281, 2
      %v495 = vsel %vm420, %v492, %v494
      %v496 = vrot.slane %v282, 2
      %v497 = vrot.slane %v283, 2
      %v498 = vsel %vm420, %v496, %v497
      %v499 = vrot.slane %v284, 2
      %v500 = vsel %vm420, %v497, %v499
      %v504 = vrot.slane %v285, 1
      %v505 = vrot.slane %v286, 1
      %v506 = vsel %vm339, %v504, %v505
      %v507 = vrot.slane %v287, 1
      %v508 = vsel %vm339, %v505, %v507
      %v509 = vrot.slane %v285, 2
      %v510 = vrot.slane %v286, 2
      %v511 = vsel %vm420, %v509, %v510
      %v512 = vrot.slane %v287, 2
      %v513 = vsel %vm420, %v510, %v512
      %v517 = vrot.slane %v288, 1
      %v518 = vrot.slane %v289, 1
      %v519 = vsel %vm339, %v517, %v518
      %v520 = vrot.slane %v290, 1
      %v521 = vsel %vm339, %v518, %v520
      %v522 = vrot.slane %v288, 2
      %v523 = vrot.slane %v289, 2
      %v524 = vsel %vm420, %v522, %v523
      %v525 = vrot.slane %v290, 2
      %v526 = vsel %vm420, %v523, %v525
      %527 = vrot.lane.b32.xlu0 %v342, 4
      %v528 = vpop.permute.xlu0 %527
      %529 = vrot.lane.b32.xlu0 %v344, 4
      %v530 = vpop.permute.xlu0 %529
      %531 = vrot.lane.b32.xlu0 %v347, 4
      %v532 = vpop.permute.xlu0 %531
      %533 = vrot.lane.b32.xlu0 %v349, 4
      %v534 = vpop.permute.xlu0 %533
      %535 = vrot.lane.b32.xlu0 %v352, 4
      %v536 = vpop.permute.xlu0 %535
      %537 = vrot.lane.b32.xlu0 %v354, 4
      %v538 = vpop.permute.xlu0 %537
      %539 = vrot.lane.b32.xlu0 %v357, 4
      %v540 = vpop.permute.xlu0 %539
      %541 = vrot.lane.b32.xlu0 %v359, 4
      %v542 = vpop.permute.xlu0 %541
      %543 = vrot.lane.b32.xlu0 %v362, 4
      %v544 = vpop.permute.xlu0 %543
      %545 = vrot.lane.b32.xlu0 %v364, 4
      %v546 = vpop.permute.xlu0 %545
      %547 = vrot.lane.b32.xlu0 %v367, 4
      %v548 = vpop.permute.xlu0 %547
      %549 = vrot.lane.b32.xlu0 %v369, 4
      %v550 = vpop.permute.xlu0 %549
      %551 = vrot.lane.b32.xlu0 %v372, 4
      %v552 = vpop.permute.xlu0 %551
      %553 = vrot.lane.b32.xlu0 %v374, 4
      %v554 = vpop.permute.xlu0 %553
      %555 = vrot.lane.b32.xlu0 %v377, 4
      %v556 = vpop.permute.xlu0 %555
      %557 = vrot.lane.b32.xlu0 %v379, 4
      %v558 = vpop.permute.xlu0 %557
      %559 = vrot.lane.b32.xlu0 %v382, 4
      %v560 = vpop.permute.xlu0 %559
      %561 = vrot.lane.b32.xlu0 %v384, 4
      %v562 = vpop.permute.xlu0 %561
      %563 = vrot.lane.b32.xlu0 %v387, 4
      %v564 = vpop.permute.xlu0 %563
      %565 = vrot.lane.b32.xlu0 %v389, 4
      %v566 = vpop.permute.xlu0 %565
      %567 = vrot.lane.b32.xlu0 %v392, 4
      %v568 = vpop.permute.xlu0 %567
      %569 = vrot.lane.b32.xlu0 %v394, 4
      %v570 = vpop.permute.xlu0 %569
      %571 = vrot.lane.b32.xlu0 %v397, 4
      %v572 = vpop.permute.xlu0 %571
      %573 = vrot.lane.b32.xlu0 %v399, 4
      %v574 = vpop.permute.xlu0 %573
      %575 = vrot.lane.b32.xlu0 %v402, 4
      %v576 = vpop.permute.xlu0 %575
      %577 = vrot.lane.b32.xlu0 %v404, 4
      %v578 = vpop.permute.xlu0 %577
      %579 = vrot.lane.b32.xlu0 %v407, 4
      %v580 = vpop.permute.xlu0 %579
      %581 = vrot.lane.b32.xlu0 %v409, 4
      %v582 = vpop.permute.xlu0 %581
      %583 = vrot.lane.b32.xlu0 %v412, 4
      %v584 = vpop.permute.xlu0 %583
      %585 = vrot.lane.b32.xlu0 %v414, 4
      %v586 = vpop.permute.xlu0 %585
      %587 = vrot.lane.b32.xlu0 %v417, 4
      %v588 = vpop.permute.xlu0 %587
      %589 = vrot.lane.b32.xlu0 %v419, 4
      %v590 = vpop.permute.xlu0 %589
      %623 = vrot.lane.b32.xlu0 %v423, 8
      %v624 = vpop.permute.xlu0 %623
      %625 = vrot.lane.b32.xlu0 %v425, 8
      %v626 = vpop.permute.xlu0 %625
      %627 = vrot.lane.b32.xlu0 %v428, 8
      %v628 = vpop.permute.xlu0 %627
      %629 = vrot.lane.b32.xlu0 %v430, 8
      %v630 = vpop.permute.xlu0 %629
      %631 = vrot.lane.b32.xlu0 %v433, 8
      %v632 = vpop.permute.xlu0 %631
      %633 = vrot.lane.b32.xlu0 %v435, 8
      %v634 = vpop.permute.xlu0 %633
      %635 = vrot.lane.b32.xlu0 %v438, 8
      %v636 = vpop.permute.xlu0 %635
      %637 = vrot.lane.b32.xlu0 %v440, 8
      %v638 = vpop.permute.xlu0 %637
      %639 = vrot.lane.b32.xlu0 %v443, 8
      %v640 = vpop.permute.xlu0 %639
      %641 = vrot.lane.b32.xlu0 %v445, 8
      %v642 = vpop.permute.xlu0 %641
      %643 = vrot.lane.b32.xlu0 %v448, 8
      %v644 = vpop.permute.xlu0 %643
      %645 = vrot.lane.b32.xlu0 %v450, 8
      %v646 = vpop.permute.xlu0 %645
      %647 = vrot.lane.b32.xlu0 %v453, 8
      %v648 = vpop.permute.xlu0 %647
      %649 = vrot.lane.b32.xlu0 %v455, 8
      %v650 = vpop.permute.xlu0 %649
      %651 = vrot.lane.b32.xlu0 %v458, 8
      %v652 = vpop.permute.xlu0 %651
      %653 = vrot.lane.b32.xlu0 %v460, 8
      %v654 = vpop.permute.xlu0 %653
      %655 = vrot.lane.b32.xlu0 %v463, 8
      %v656 = vpop.permute.xlu0 %655
      %657 = vrot.lane.b32.xlu0 %v465, 8
      %v658 = vpop.permute.xlu0 %657
      %659 = vrot.lane.b32.xlu0 %v468, 8
      %v660 = vpop.permute.xlu0 %659
      %661 = vrot.lane.b32.xlu0 %v470, 8
      %v662 = vpop.permute.xlu0 %661
      %663 = vrot.lane.b32.xlu0 %v473, 8
      %v664 = vpop.permute.xlu0 %663
      %665 = vrot.lane.b32.xlu0 %v475, 8
      %v666 = vpop.permute.xlu0 %665
      %667 = vrot.lane.b32.xlu0 %v478, 8
      %v668 = vpop.permute.xlu0 %667
      %669 = vrot.lane.b32.xlu0 %v480, 8
      %v670 = vpop.permute.xlu0 %669
      %671 = vrot.lane.b32.xlu0 %v483, 8
      %v672 = vpop.permute.xlu0 %671
      %673 = vrot.lane.b32.xlu0 %v485, 8
      %v674 = vpop.permute.xlu0 %673
      %675 = vrot.lane.b32.xlu0 %v488, 8
      %v676 = vpop.permute.xlu0 %675
      %677 = vrot.lane.b32.xlu0 %v490, 8
      %v678 = vpop.permute.xlu0 %677
      %679 = vrot.lane.b32.xlu0 %v493, 8
      %v680 = vpop.permute.xlu0 %679
      %681 = vrot.lane.b32.xlu0 %v495, 8
      %v682 = vpop.permute.xlu0 %681
      %683 = vrot.lane.b32.xlu0 %v498, 8
      %v684 = vpop.permute.xlu0 %683
      %685 = vrot.lane.b32.xlu0 %v500, 8
      %v686 = vpop.permute.xlu0 %685
      %719 = vrot.lane.b32.xlu0 %v240, 12
      %v720 = vpop.permute.xlu0 %719
      %721 = vrot.lane.b32.xlu0 %v241, 12
      %v722 = vpop.permute.xlu0 %721
      %723 = vrot.lane.b32.xlu0 %v243, 12
      %v724 = vpop.permute.xlu0 %723
      %725 = vrot.lane.b32.xlu0 %v244, 12
      %v726 = vpop.permute.xlu0 %725
      %727 = vrot.lane.b32.xlu0 %v246, 12
      %v728 = vpop.permute.xlu0 %727
      %729 = vrot.lane.b32.xlu0 %v247, 12
      %v730 = vpop.permute.xlu0 %729
      %731 = vrot.lane.b32.xlu0 %v249, 12
      %v732 = vpop.permute.xlu0 %731
      %733 = vrot.lane.b32.xlu0 %v250, 12
      %v734 = vpop.permute.xlu0 %733
      %735 = vrot.lane.b32.xlu0 %v252, 12
      %v736 = vpop.permute.xlu0 %735
      %737 = vrot.lane.b32.xlu0 %v253, 12
      %v738 = vpop.permute.xlu0 %737
      %739 = vrot.lane.b32.xlu0 %v255, 12
      %v740 = vpop.permute.xlu0 %739
      %741 = vrot.lane.b32.xlu0 %v256, 12
      %v742 = vpop.permute.xlu0 %741
      %743 = vrot.lane.b32.xlu0 %v258, 12
      %v744 = vpop.permute.xlu0 %743
      %745 = vrot.lane.b32.xlu0 %v259, 12
      %v746 = vpop.permute.xlu0 %745
      %747 = vrot.lane.b32.xlu0 %v261, 12
      %v748 = vpop.permute.xlu0 %747
      %749 = vrot.lane.b32.xlu0 %v262, 12
      %v750 = vpop.permute.xlu0 %749
      %751 = vrot.lane.b32.xlu0 %v264, 12
      %v752 = vpop.permute.xlu0 %751
      %753 = vrot.lane.b32.xlu0 %v265, 12
      %v754 = vpop.permute.xlu0 %753
      %755 = vrot.lane.b32.xlu0 %v267, 12
      %v756 = vpop.permute.xlu0 %755
      %757 = vrot.lane.b32.xlu0 %v268, 12
      %v758 = vpop.permute.xlu0 %757
      %759 = vrot.lane.b32.xlu0 %v270, 12
      %v760 = vpop.permute.xlu0 %759
      %761 = vrot.lane.b32.xlu0 %v271, 12
      %v762 = vpop.permute.xlu0 %761
      %763 = vrot.lane.b32.xlu0 %v273, 12
      %v764 = vpop.permute.xlu0 %763
      %765 = vrot.lane.b32.xlu0 %v274, 12
      %v766 = vpop.permute.xlu0 %765
      %767 = vrot.lane.b32.xlu0 %v276, 12
      %v768 = vpop.permute.xlu0 %767
      %769 = vrot.lane.b32.xlu0 %v277, 12
      %v770 = vpop.permute.xlu0 %769
      %771 = vrot.lane.b32.xlu0 %v279, 12
      %v772 = vpop.permute.xlu0 %771
      %773 = vrot.lane.b32.xlu0 %v280, 12
      %v774 = vpop.permute.xlu0 %773
      %775 = vrot.lane.b32.xlu0 %v282, 12
      %v776 = vpop.permute.xlu0 %775
      %777 = vrot.lane.b32.xlu0 %v283, 12
      %v778 = vpop.permute.xlu0 %777
      %779 = vrot.lane.b32.xlu0 %v285, 12
      %v780 = vpop.permute.xlu0 %779
      %781 = vrot.lane.b32.xlu0 %v286, 12
      %v782 = vpop.permute.xlu0 %781
      %815 = vrot.lane.b32.xlu0 %v347, 16
      %v816 = vpop.permute.xlu0 %815
      %817 = vrot.lane.b32.xlu0 %v349, 16
      %v818 = vpop.permute.xlu0 %817
      %819 = vrot.lane.b32.xlu0 %v352, 16
      %v820 = vpop.permute.xlu0 %819
      %821 = vrot.lane.b32.xlu0 %v354, 16
      %v822 = vpop.permute.xlu0 %821
      %823 = vrot.lane.b32.xlu0 %v357, 16
      %v824 = vpop.permute.xlu0 %823
      %825 = vrot.lane.b32.xlu0 %v359, 16
      %v826 = vpop.permute.xlu0 %825
      %827 = vrot.lane.b32.xlu0 %v362, 16
      %v828 = vpop.permute.xlu0 %827
      %829 = vrot.lane.b32.xlu0 %v364, 16
      %v830 = vpop.permute.xlu0 %829
      %831 = vrot.lane.b32.xlu0 %v367, 16
      %v832 = vpop.permute.xlu0 %831
      %833 = vrot.lane.b32.xlu0 %v369, 16
      %v834 = vpop.permute.xlu0 %833
      %835 = vrot.lane.b32.xlu0 %v372, 16
      %v836 = vpop.permute.xlu0 %835
      %837 = vrot.lane.b32.xlu0 %v374, 16
      %v838 = vpop.permute.xlu0 %837
      %839 = vrot.lane.b32.xlu0 %v377, 16
      %v840 = vpop.permute.xlu0 %839
      %841 = vrot.lane.b32.xlu0 %v379, 16
      %v842 = vpop.permute.xlu0 %841
      %843 = vrot.lane.b32.xlu0 %v382, 16
      %v844 = vpop.permute.xlu0 %843
      %845 = vrot.lane.b32.xlu0 %v384, 16
      %v846 = vpop.permute.xlu0 %845
      %847 = vrot.lane.b32.xlu0 %v387, 16
      %v848 = vpop.permute.xlu0 %847
      %849 = vrot.lane.b32.xlu0 %v389, 16
      %v850 = vpop.permute.xlu0 %849
      %851 = vrot.lane.b32.xlu0 %v392, 16
      %v852 = vpop.permute.xlu0 %851
      %853 = vrot.lane.b32.xlu0 %v394, 16
      %v854 = vpop.permute.xlu0 %853
      %855 = vrot.lane.b32.xlu0 %v397, 16
      %v856 = vpop.permute.xlu0 %855
      %857 = vrot.lane.b32.xlu0 %v399, 16
      %v858 = vpop.permute.xlu0 %857
      %859 = vrot.lane.b32.xlu0 %v402, 16
      %v860 = vpop.permute.xlu0 %859
      %861 = vrot.lane.b32.xlu0 %v404, 16
      %v862 = vpop.permute.xlu0 %861
      %863 = vrot.lane.b32.xlu0 %v407, 16
      %v864 = vpop.permute.xlu0 %863
      %865 = vrot.lane.b32.xlu0 %v409, 16
      %v866 = vpop.permute.xlu0 %865
      %867 = vrot.lane.b32.xlu0 %v412, 16
      %v868 = vpop.permute.xlu0 %867
      %869 = vrot.lane.b32.xlu0 %v414, 16
      %v870 = vpop.permute.xlu0 %869
      %871 = vrot.lane.b32.xlu0 %v417, 16
      %v872 = vpop.permute.xlu0 %871
      %873 = vrot.lane.b32.xlu0 %v419, 16
      %v874 = vpop.permute.xlu0 %873
      %875 = vrot.lane.b32.xlu0 %v506, 16
      %v876 = vpop.permute.xlu0 %875
      %877 = vrot.lane.b32.xlu0 %v508, 16
      %v878 = vpop.permute.xlu0 %877
      %911 = vrot.lane.b32.xlu0 %v428, 20
      %v912 = vpop.permute.xlu0 %911
      %913 = vrot.lane.b32.xlu0 %v430, 20
      %v914 = vpop.permute.xlu0 %913
      %915 = vrot.lane.b32.xlu0 %v433, 20
      %v916 = vpop.permute.xlu0 %915
      %917 = vrot.lane.b32.xlu0 %v435, 20
      %v918 = vpop.permute.xlu0 %917
      %919 = vrot.lane.b32.xlu0 %v438, 20
      %v920 = vpop.permute.xlu0 %919
      %921 = vrot.lane.b32.xlu0 %v440, 20
      %v922 = vpop.permute.xlu0 %921
      %923 = vrot.lane.b32.xlu0 %v443, 20
      %v924 = vpop.permute.xlu0 %923
      %925 = vrot.lane.b32.xlu0 %v445, 20
      %v926 = vpop.permute.xlu0 %925
      %927 = vrot.lane.b32.xlu0 %v448, 20
      %v928 = vpop.permute.xlu0 %927
      %929 = vrot.lane.b32.xlu0 %v450, 20
      %v930 = vpop.permute.xlu0 %929
      %931 = vrot.lane.b32.xlu0 %v453, 20
      %v932 = vpop.permute.xlu0 %931
      %933 = vrot.lane.b32.xlu0 %v455, 20
      %v934 = vpop.permute.xlu0 %933
      %935 = vrot.lane.b32.xlu0 %v458, 20
      %v936 = vpop.permute.xlu0 %935
      %937 = vrot.lane.b32.xlu0 %v460, 20
      %v938 = vpop.permute.xlu0 %937
      %939 = vrot.lane.b32.xlu0 %v463, 20
      %v940 = vpop.permute.xlu0 %939
      %941 = vrot.lane.b32.xlu0 %v465, 20
      %v942 = vpop.permute.xlu0 %941
      %943 = vrot.lane.b32.xlu0 %v468, 20
      %v944 = vpop.permute.xlu0 %943
      %945 = vrot.lane.b32.xlu0 %v470, 20
      %v946 = vpop.permute.xlu0 %945
      %947 = vrot.lane.b32.xlu0 %v473, 20
      %v948 = vpop.permute.xlu0 %947
      %949 = vrot.lane.b32.xlu0 %v475, 20
      %v950 = vpop.permute.xlu0 %949
      %951 = vrot.lane.b32.xlu0 %v478, 20
      %v952 = vpop.permute.xlu0 %951
      %953 = vrot.lane.b32.xlu0 %v480, 20
      %v954 = vpop.permute.xlu0 %953
      %955 = vrot.lane.b32.xlu0 %v483, 20
      %v956 = vpop.permute.xlu0 %955
      %957 = vrot.lane.b32.xlu0 %v485, 20
      %v958 = vpop.permute.xlu0 %957
      %959 = vrot.lane.b32.xlu0 %v488, 20
      %v960 = vpop.permute.xlu0 %959
      %961 = vrot.lane.b32.xlu0 %v490, 20
      %v962 = vpop.permute.xlu0 %961
      %963 = vrot.lane.b32.xlu0 %v493, 20
      %v964 = vpop.permute.xlu0 %963
      %965 = vrot.lane.b32.xlu0 %v495, 20
      %v966 = vpop.permute.xlu0 %965
      %967 = vrot.lane.b32.xlu0 %v498, 20
      %v968 = vpop.permute.xlu0 %967
      %969 = vrot.lane.b32.xlu0 %v500, 20
      %v970 = vpop.permute.xlu0 %969
      %971 = vrot.lane.b32.xlu0 %v511, 20
      %v972 = vpop.permute.xlu0 %971
      %973 = vrot.lane.b32.xlu0 %v513, 20
      %v974 = vpop.permute.xlu0 %973
      %1007 = vrot.lane.b32.xlu0 %v243, 24
      %v1008 = vpop.permute.xlu0 %1007
      %1009 = vrot.lane.b32.xlu0 %v244, 24
      %v1010 = vpop.permute.xlu0 %1009
      %1011 = vrot.lane.b32.xlu0 %v246, 24
      %v1012 = vpop.permute.xlu0 %1011
      %1013 = vrot.lane.b32.xlu0 %v247, 24
      %v1014 = vpop.permute.xlu0 %1013
      %1015 = vrot.lane.b32.xlu0 %v249, 24
      %v1016 = vpop.permute.xlu0 %1015
      %1017 = vrot.lane.b32.xlu0 %v250, 24
      %v1018 = vpop.permute.xlu0 %1017
      %1019 = vrot.lane.b32.xlu0 %v252, 24
      %v1020 = vpop.permute.xlu0 %1019
      %1021 = vrot.lane.b32.xlu0 %v253, 24
      %v1022 = vpop.permute.xlu0 %1021
      %1023 = vrot.lane.b32.xlu0 %v255, 24
      %v1024 = vpop.permute.xlu0 %1023
      %1025 = vrot.lane.b32.xlu0 %v256, 24
      %v1026 = vpop.permute.xlu0 %1025
      %1027 = vrot.lane.b32.xlu0 %v258, 24
      %v1028 = vpop.permute.xlu0 %1027
      %1029 = vrot.lane.b32.xlu0 %v259, 24
      %v1030 = vpop.permute.xlu0 %1029
      %1031 = vrot.lane.b32.xlu0 %v261, 24
      %v1032 = vpop.permute.xlu0 %1031
      %1033 = vrot.lane.b32.xlu0 %v262, 24
      %v1034 = vpop.permute.xlu0 %1033
      %1035 = vrot.lane.b32.xlu0 %v264, 24
      %v1036 = vpop.permute.xlu0 %1035
      %1037 = vrot.lane.b32.xlu0 %v265, 24
      %v1038 = vpop.permute.xlu0 %1037
      %1039 = vrot.lane.b32.xlu0 %v267, 24
      %v1040 = vpop.permute.xlu0 %1039
      %1041 = vrot.lane.b32.xlu0 %v268, 24
      %v1042 = vpop.permute.xlu0 %1041
      %1043 = vrot.lane.b32.xlu0 %v270, 24
      %v1044 = vpop.permute.xlu0 %1043
      %1045 = vrot.lane.b32.xlu0 %v271, 24
      %v1046 = vpop.permute.xlu0 %1045
      %1047 = vrot.lane.b32.xlu0 %v273, 24
      %v1048 = vpop.permute.xlu0 %1047
      %1049 = vrot.lane.b32.xlu0 %v274, 24
      %v1050 = vpop.permute.xlu0 %1049
      %1051 = vrot.lane.b32.xlu0 %v276, 24
      %v1052 = vpop.permute.xlu0 %1051
      %1053 = vrot.lane.b32.xlu0 %v277, 24
      %v1054 = vpop.permute.xlu0 %1053
      %1055 = vrot.lane.b32.xlu0 %v279, 24
      %v1056 = vpop.permute.xlu0 %1055
      %1057 = vrot.lane.b32.xlu0 %v280, 24
      %v1058 = vpop.permute.xlu0 %1057
      %1059 = vrot.lane.b32.xlu0 %v282, 24
      %v1060 = vpop.permute.xlu0 %1059
      %1061 = vrot.lane.b32.xlu0 %v283, 24
      %v1062 = vpop.permute.xlu0 %1061
      %1063 = vrot.lane.b32.xlu0 %v285, 24
      %v1064 = vpop.permute.xlu0 %1063
      %1065 = vrot.lane.b32.xlu0 %v286, 24
      %v1066 = vpop.permute.xlu0 %1065
      %1067 = vrot.lane.b32.xlu0 %v288, 24
      %v1068 = vpop.permute.xlu0 %1067
      %1069 = vrot.lane.b32.xlu0 %v289, 24
      %v1070 = vpop.permute.xlu0 %1069
      %1103 = vrot.lane.b32.xlu0 %v352, 28
      %v1104 = vpop.permute.xlu0 %1103
      %1105 = vrot.lane.b32.xlu0 %v354, 28
      %v1106 = vpop.permute.xlu0 %1105
      %1107 = vrot.lane.b32.xlu0 %v357, 28
      %v1108 = vpop.permute.xlu0 %1107
      %1109 = vrot.lane.b32.xlu0 %v359, 28
      %v1110 = vpop.permute.xlu0 %1109
      %1111 = vrot.lane.b32.xlu0 %v362, 28
      %v1112 = vpop.permute.xlu0 %1111
      %1113 = vrot.lane.b32.xlu0 %v364, 28
      %v1114 = vpop.permute.xlu0 %1113
      %1115 = vrot.lane.b32.xlu0 %v367, 28
      %v1116 = vpop.permute.xlu0 %1115
      %1117 = vrot.lane.b32.xlu0 %v369, 28
      %v1118 = vpop.permute.xlu0 %1117
      %1119 = vrot.lane.b32.xlu0 %v372, 28
      %v1120 = vpop.permute.xlu0 %1119
      %1121 = vrot.lane.b32.xlu0 %v374, 28
      %v1122 = vpop.permute.xlu0 %1121
      %1123 = vrot.lane.b32.xlu0 %v377, 28
      %v1124 = vpop.permute.xlu0 %1123
      %1125 = vrot.lane.b32.xlu0 %v379, 28
      %v1126 = vpop.permute.xlu0 %1125
      %1127 = vrot.lane.b32.xlu0 %v382, 28
      %v1128 = vpop.permute.xlu0 %1127
      %1129 = vrot.lane.b32.xlu0 %v384, 28
      %v1130 = vpop.permute.xlu0 %1129
      %1131 = vrot.lane.b32.xlu0 %v387, 28
      %v1132 = vpop.permute.xlu0 %1131
      %1133 = vrot.lane.b32.xlu0 %v389, 28
      %v1134 = vpop.permute.xlu0 %1133
      %1135 = vrot.lane.b32.xlu0 %v392, 28
      %v1136 = vpop.permute.xlu0 %1135
      %1137 = vrot.lane.b32.xlu0 %v394, 28
      %v1138 = vpop.permute.xlu0 %1137
      %1139 = vrot.lane.b32.xlu0 %v397, 28
      %v1140 = vpop.permute.xlu0 %1139
      %1141 = vrot.lane.b32.xlu0 %v399, 28
      %v1142 = vpop.permute.xlu0 %1141
      %1143 = vrot.lane.b32.xlu0 %v402, 28
      %v1144 = vpop.permute.xlu0 %1143
      %1145 = vrot.lane.b32.xlu0 %v404, 28
      %v1146 = vpop.permute.xlu0 %1145
      %1147 = vrot.lane.b32.xlu0 %v407, 28
      %v1148 = vpop.permute.xlu0 %1147
      %1149 = vrot.lane.b32.xlu0 %v409, 28
      %v1150 = vpop.permute.xlu0 %1149
      %1151 = vrot.lane.b32.xlu0 %v412, 28
      %v1152 = vpop.permute.xlu0 %1151
      %1153 = vrot.lane.b32.xlu0 %v414, 28
      %v1154 = vpop.permute.xlu0 %1153
      %1155 = vrot.lane.b32.xlu0 %v417, 28
      %v1156 = vpop.permute.xlu0 %1155
      %1157 = vrot.lane.b32.xlu0 %v419, 28
      %v1158 = vpop.permute.xlu0 %1157
      %1159 = vrot.lane.b32.xlu0 %v506, 28
      %v1160 = vpop.permute.xlu0 %1159
      %1161 = vrot.lane.b32.xlu0 %v508, 28
      %v1162 = vpop.permute.xlu0 %1161
      %1163 = vrot.lane.b32.xlu0 %v519, 28
      %v1164 = vpop.permute.xlu0 %1163
      %1165 = vrot.lane.b32.xlu0 %v521, 28
      %v1166 = vpop.permute.xlu0 %1165
      %1199 = vrot.lane.b32.xlu0 %v433, 32
      %v1200 = vpop.permute.xlu0 %1199
      %1201 = vrot.lane.b32.xlu0 %v435, 32
      %v1202 = vpop.permute.xlu0 %1201
      %1203 = vrot.lane.b32.xlu0 %v438, 32
      %v1204 = vpop.permute.xlu0 %1203
      %1205 = vrot.lane.b32.xlu0 %v440, 32
      %v1206 = vpop.permute.xlu0 %1205
      %1207 = vrot.lane.b32.xlu0 %v443, 32
      %v1208 = vpop.permute.xlu0 %1207
      %1209 = vrot.lane.b32.xlu0 %v445, 32
      %v1210 = vpop.permute.xlu0 %1209
      %1211 = vrot.lane.b32.xlu0 %v448, 32
      %v1212 = vpop.permute.xlu0 %1211
      %1213 = vrot.lane.b32.xlu0 %v450, 32
      %v1214 = vpop.permute.xlu0 %1213
      %1215 = vrot.lane.b32.xlu0 %v453, 32
      %v1216 = vpop.permute.xlu0 %1215
      %1217 = vrot.lane.b32.xlu0 %v455, 32
      %v1218 = vpop.permute.xlu0 %1217
      %1219 = vrot.lane.b32.xlu0 %v458, 32
      %v1220 = vpop.permute.xlu0 %1219
      %1221 = vrot.lane.b32.xlu0 %v460, 32
      %v1222 = vpop.permute.xlu0 %1221
      %1223 = vrot.lane.b32.xlu0 %v463, 32
      %v1224 = vpop.permute.xlu0 %1223
      %1225 = vrot.lane.b32.xlu0 %v465, 32
      %v1226 = vpop.permute.xlu0 %1225
      %1227 = vrot.lane.b32.xlu0 %v468, 32
      %v1228 = vpop.permute.xlu0 %1227
      %1229 = vrot.lane.b32.xlu0 %v470, 32
      %v1230 = vpop.permute.xlu0 %1229
      %1231 = vrot.lane.b32.xlu0 %v473, 32
      %v1232 = vpop.permute.xlu0 %1231
      %1233 = vrot.lane.b32.xlu0 %v475, 32
      %v1234 = vpop.permute.xlu0 %1233
      %1235 = vrot.lane.b32.xlu0 %v478, 32
      %v1236 = vpop.permute.xlu0 %1235
      %1237 = vrot.lane.b32.xlu0 %v480, 32
      %v1238 = vpop.permute.xlu0 %1237
      %1239 = vrot.lane.b32.xlu0 %v483, 32
      %v1240 = vpop.permute.xlu0 %1239
      %1241 = vrot.lane.b32.xlu0 %v485, 32
      %v1242 = vpop.permute.xlu0 %1241
      %1243 = vrot.lane.b32.xlu0 %v488, 32
      %v1244 = vpop.permute.xlu0 %1243
      %1245 = vrot.lane.b32.xlu0 %v490, 32
      %v1246 = vpop.permute.xlu0 %1245
      %1247 = vrot.lane.b32.xlu0 %v493, 32
      %v1248 = vpop.permute.xlu0 %1247
      %1249 = vrot.lane.b32.xlu0 %v495, 32
      %v1250 = vpop.permute.xlu0 %1249
      %1251 = vrot.lane.b32.xlu0 %v498, 32
      %v1252 = vpop.permute.xlu0 %1251
      %1253 = vrot.lane.b32.xlu0 %v500, 32
      %v1254 = vpop.permute.xlu0 %1253
      %1255 = vrot.lane.b32.xlu0 %v511, 32
      %v1256 = vpop.permute.xlu0 %1255
      %1257 = vrot.lane.b32.xlu0 %v513, 32
      %v1258 = vpop.permute.xlu0 %1257
      %1259 = vrot.lane.b32.xlu0 %v524, 32
      %v1260 = vpop.permute.xlu0 %1259
      %1261 = vrot.lane.b32.xlu0 %v526, 32
      %v1262 = vpop.permute.xlu0 %1261
      %vm1295 = vcmask 31744
      %v1296 = vsel %vm1295, %v237, %v528
      %v1297 = vsel %vm1295, %v238, %v530
      %v1298 = vsel %vm1295, %v240, %v532
      %v1299 = vsel %vm1295, %v241, %v534
      %v1300 = vsel %vm1295, %v243, %v536
      %v1301 = vsel %vm1295, %v244, %v538
      %v1302 = vsel %vm1295, %v246, %v540
      %v1303 = vsel %vm1295, %v247, %v542
      %v1304 = vsel %vm1295, %v249, %v544
      %v1305 = vsel %vm1295, %v250, %v546
      %v1306 = vsel %vm1295, %v252, %v548
      %v1307 = vsel %vm1295, %v253, %v550
      %v1308 = vsel %vm1295, %v255, %v552
      %v1309 = vsel %vm1295, %v256, %v554
      %v1310 = vsel %vm1295, %v258, %v556
      %v1311 = vsel %vm1295, %v259, %v558
      %v1312 = vsel %vm1295, %v261, %v560
      %v1313 = vsel %vm1295, %v262, %v562
      %v1314 = vsel %vm1295, %v264, %v564
      %v1315 = vsel %vm1295, %v265, %v566
      %v1316 = vsel %vm1295, %v267, %v568
      %v1317 = vsel %vm1295, %v268, %v570
      %v1318 = vsel %vm1295, %v270, %v572
      %v1319 = vsel %vm1295, %v271, %v574
      %v1320 = vsel %vm1295, %v273, %v576
      %v1321 = vsel %vm1295, %v274, %v578
      %v1322 = vsel %vm1295, %v276, %v580
      %v1323 = vsel %vm1295, %v277, %v582
      %v1324 = vsel %vm1295, %v279, %v584
      %v1325 = vsel %vm1295, %v280, %v586
      %v1326 = vsel %vm1295, %v282, %v588
      %v1327 = vsel %vm1295, %v283, %v590
      %vm1328 = vcmask 64512
      %v1329 = vsel %vm1328, %v1296, %v624
      %v1330 = vsel %vm1328, %v1297, %v626
      %v1331 = vsel %vm1328, %v1298, %v628
      %v1332 = vsel %vm1328, %v1299, %v630
      %v1333 = vsel %vm1328, %v1300, %v632
      %v1334 = vsel %vm1328, %v1301, %v634
      %v1335 = vsel %vm1328, %v1302, %v636
      %v1336 = vsel %vm1328, %v1303, %v638
      %v1337 = vsel %vm1328, %v1304, %v640
      %v1338 = vsel %vm1328, %v1305, %v642
      %v1339 = vsel %vm1328, %v1306, %v644
      %v1340 = vsel %vm1328, %v1307, %v646
      %v1341 = vsel %vm1328, %v1308, %v648
      %v1342 = vsel %vm1328, %v1309, %v650
      %v1343 = vsel %vm1328, %v1310, %v652
      %v1344 = vsel %vm1328, %v1311, %v654
      %v1345 = vsel %vm1328, %v1312, %v656
      %v1346 = vsel %vm1328, %v1313, %v658
      %v1347 = vsel %vm1328, %v1314, %v660
      %v1348 = vsel %vm1328, %v1315, %v662
      %v1349 = vsel %vm1328, %v1316, %v664
      %v1350 = vsel %vm1328, %v1317, %v666
      %v1351 = vsel %vm1328, %v1318, %v668
      %v1352 = vsel %vm1328, %v1319, %v670
      %v1353 = vsel %vm1328, %v1320, %v672
      %v1354 = vsel %vm1328, %v1321, %v674
      %v1355 = vsel %vm1328, %v1322, %v676
      %v1356 = vsel %vm1328, %v1323, %v678
      %v1357 = vsel %vm1328, %v1324, %v680
      %v1358 = vsel %vm1328, %v1325, %v682
      %v1359 = vsel %vm1328, %v1326, %v684
      %v1360 = vsel %vm1328, %v1327, %v686
      %vm1361 = vcmask 97280
      %v1362 = vsel %vm1361, %v1329, %v720
      %v1363 = vsel %vm1361, %v1330, %v722
      %v1364 = vsel %vm1361, %v1331, %v724
      %v1365 = vsel %vm1361, %v1332, %v726
      %v1366 = vsel %vm1361, %v1333, %v728
      %v1367 = vsel %vm1361, %v1334, %v730
      %v1368 = vsel %vm1361, %v1335, %v732
      %v1369 = vsel %vm1361, %v1336, %v734
      %v1370 = vsel %vm1361, %v1337, %v736
      %v1371 = vsel %vm1361, %v1338, %v738
      %v1372 = vsel %vm1361, %v1339, %v740
      %v1373 = vsel %vm1361, %v1340, %v742
      %v1374 = vsel %vm1361, %v1341, %v744
      %v1375 = vsel %vm1361, %v1342, %v746
      %v1376 = vsel %vm1361, %v1343, %v748
      %v1377 = vsel %vm1361, %v1344, %v750
      %v1378 = vsel %vm1361, %v1345, %v752
      %v1379 = vsel %vm1361, %v1346, %v754
      %v1380 = vsel %vm1361, %v1347, %v756
      %v1381 = vsel %vm1361, %v1348, %v758
      %v1382 = vsel %vm1361, %v1349, %v760
      %v1383 = vsel %vm1361, %v1350, %v762
      %v1384 = vsel %vm1361, %v1351, %v764
      %v1385 = vsel %vm1361, %v1352, %v766
      %v1386 = vsel %vm1361, %v1353, %v768
      %v1387 = vsel %vm1361, %v1354, %v770
      %v1388 = vsel %vm1361, %v1355, %v772
      %v1389 = vsel %vm1361, %v1356, %v774
      %v1390 = vsel %vm1361, %v1357, %v776
      %v1391 = vsel %vm1361, %v1358, %v778
      %v1392 = vsel %vm1361, %v1359, %v780
      %v1393 = vsel %vm1361, %v1360, %v782
      %vm1394 = vcmask 130048
      %v1395 = vsel %vm1394, %v1362, %v816
      %v1396 = vsel %vm1394, %v1363, %v818
      %v1397 = vsel %vm1394, %v1364, %v820
      %v1398 = vsel %vm1394, %v1365, %v822
      %v1399 = vsel %vm1394, %v1366, %v824
      %v1400 = vsel %vm1394, %v1367, %v826
      %v1401 = vsel %vm1394, %v1368, %v828
      %v1402 = vsel %vm1394, %v1369, %v830
      %v1403 = vsel %vm1394, %v1370, %v832
      %v1404 = vsel %vm1394, %v1371, %v834
      %v1405 = vsel %vm1394, %v1372, %v836
      %v1406 = vsel %vm1394, %v1373, %v838
      %v1407 = vsel %vm1394, %v1374, %v840
      %v1408 = vsel %vm1394, %v1375, %v842
      %v1409 = vsel %vm1394, %v1376, %v844
      %v1410 = vsel %vm1394, %v1377, %v846
      %v1411 = vsel %vm1394, %v1378, %v848
      %v1412 = vsel %vm1394, %v1379, %v850
      %v1413 = vsel %vm1394, %v1380, %v852
      %v1414 = vsel %vm1394, %v1381, %v854
      %v1415 = vsel %vm1394, %v1382, %v856
      %v1416 = vsel %vm1394, %v1383, %v858
      %v1417 = vsel %vm1394, %v1384, %v860
      %v1418 = vsel %vm1394, %v1385, %v862
      %v1419 = vsel %vm1394, %v1386, %v864
      %v1420 = vsel %vm1394, %v1387, %v866
      %v1421 = vsel %vm1394, %v1388, %v868
      %v1422 = vsel %vm1394, %v1389, %v870
      %v1423 = vsel %vm1394, %v1390, %v872
      %v1424 = vsel %vm1394, %v1391, %v874
      %v1425 = vsel %vm1394, %v1392, %v876
      %v1426 = vsel %vm1394, %v1393, %v878
      %vm1427 = vcmask 162816
      %v1428 = vsel %vm1427, %v1395, %v912
      %v1429 = vsel %vm1427, %v1396, %v914
      %v1430 = vsel %vm1427, %v1397, %v916
      %v1431 = vsel %vm1427, %v1398, %v918
      %v1432 = vsel %vm1427, %v1399, %v920
      %v1433 = vsel %vm1427, %v1400, %v922
      %v1434 = vsel %vm1427, %v1401, %v924
      %v1435 = vsel %vm1427, %v1402, %v926
      %v1436 = vsel %vm1427, %v1403, %v928
      %v1437 = vsel %vm1427, %v1404, %v930
      %v1438 = vsel %vm1427, %v1405, %v932
      %v1439 = vsel %vm1427, %v1406, %v934
      %v1440 = vsel %vm1427, %v1407, %v936
      %v1441 = vsel %vm1427, %v1408, %v938
      %v1442 = vsel %vm1427, %v1409, %v940
      %v1443 = vsel %vm1427, %v1410, %v942
      %v1444 = vsel %vm1427, %v1411, %v944
      %v1445 = vsel %vm1427, %v1412, %v946
      %v1446 = vsel %vm1427, %v1413, %v948
      %v1447 = vsel %vm1427, %v1414, %v950
      %v1448 = vsel %vm1427, %v1415, %v952
      %v1449 = vsel %vm1427, %v1416, %v954
      %v1450 = vsel %vm1427, %v1417, %v956
      %v1451 = vsel %vm1427, %v1418, %v958
      %v1452 = vsel %vm1427, %v1419, %v960
      %v1453 = vsel %vm1427, %v1420, %v962
      %v1454 = vsel %vm1427, %v1421, %v964
      %v1455 = vsel %vm1427, %v1422, %v966
      %v1456 = vsel %vm1427, %v1423, %v968
      %v1457 = vsel %vm1427, %v1424, %v970
      %v1458 = vsel %vm1427, %v1425, %v972
      %v1459 = vsel %vm1427, %v1426, %v974
      %vm1460 = vcmask 195584
      %v1461 = vsel %vm1460, %v1428, %v1008
      %v1462 = vsel %vm1460, %v1429, %v1010
      %v1463 = vsel %vm1460, %v1430, %v1012
      %v1464 = vsel %vm1460, %v1431, %v1014
      %v1465 = vsel %vm1460, %v1432, %v1016
      %v1466 = vsel %vm1460, %v1433, %v1018
      %v1467 = vsel %vm1460, %v1434, %v1020
      %v1468 = vsel %vm1460, %v1435, %v1022
      %v1469 = vsel %vm1460, %v1436, %v1024
      %v1470 = vsel %vm1460, %v1437, %v1026
      %v1471 = vsel %vm1460, %v1438, %v1028
      %v1472 = vsel %vm1460, %v1439, %v1030
      %v1473 = vsel %vm1460, %v1440, %v1032
      %v1474 = vsel %vm1460, %v1441, %v1034
      %v1475 = vsel %vm1460, %v1442, %v1036
      %v1476 = vsel %vm1460, %v1443, %v1038
      %v1477 = vsel %vm1460, %v1444, %v1040
      %v1478 = vsel %vm1460, %v1445, %v1042
      %v1479 = vsel %vm1460, %v1446, %v1044
      %v1480 = vsel %vm1460, %v1447, %v1046
      %v1481 = vsel %vm1460, %v1448, %v1048
      %v1482 = vsel %vm1460, %v1449, %v1050
      %v1483 = vsel %vm1460, %v1450, %v1052
      %v1484 = vsel %vm1460, %v1451, %v1054
      %v1485 = vsel %vm1460, %v1452, %v1056
      %v1486 = vsel %vm1460, %v1453, %v1058
      %v1487 = vsel %vm1460, %v1454, %v1060
      %v1488 = vsel %vm1460, %v1455, %v1062
      %v1489 = vsel %vm1460, %v1456, %v1064
      %v1490 = vsel %vm1460, %v1457, %v1066
      %v1491 = vsel %vm1460, %v1458, %v1068
      %v1492 = vsel %vm1460, %v1459, %v1070
      %vm1493 = vcmask 228352
      %v1494 = vsel %vm1493, %v1461, %v1104
      %v1495 = vsel %vm1493, %v1462, %v1106
      %v1496 = vsel %vm1493, %v1463, %v1108
      %v1497 = vsel %vm1493, %v1464, %v1110
      %v1498 = vsel %vm1493, %v1465, %v1112
      %v1499 = vsel %vm1493, %v1466, %v1114
      %v1500 = vsel %vm1493, %v1467, %v1116
      %v1501 = vsel %vm1493, %v1468, %v1118
      %v1502 = vsel %vm1493, %v1469, %v1120
      %v1503 = vsel %vm1493, %v1470, %v1122
      %v1504 = vsel %vm1493, %v1471, %v1124
      %v1505 = vsel %vm1493, %v1472, %v1126
      %v1506 = vsel %vm1493, %v1473, %v1128
      %v1507 = vsel %vm1493, %v1474, %v1130
      %v1508 = vsel %vm1493, %v1475, %v1132
      %v1509 = vsel %vm1493, %v1476, %v1134
      %v1510 = vsel %vm1493, %v1477, %v1136
      %v1511 = vsel %vm1493, %v1478, %v1138
      %v1512 = vsel %vm1493, %v1479, %v1140
      %v1513 = vsel %vm1493, %v1480, %v1142
      %v1514 = vsel %vm1493, %v1481, %v1144
      %v1515 = vsel %vm1493, %v1482, %v1146
      %v1516 = vsel %vm1493, %v1483, %v1148
      %v1517 = vsel %vm1493, %v1484, %v1150
      %v1518 = vsel %vm1493, %v1485, %v1152
      %v1519 = vsel %vm1493, %v1486, %v1154
      %v1520 = vsel %vm1493, %v1487, %v1156
      %v1521 = vsel %vm1493, %v1488, %v1158
      %v1522 = vsel %vm1493, %v1489, %v1160
      %v1523 = vsel %vm1493, %v1490, %v1162
      %v1524 = vsel %vm1493, %v1491, %v1164
      %v1525 = vsel %vm1493, %v1492, %v1166
      %vm1526 = vcmask 261120
      %v1527 = vsel %vm1526, %v1494, %v1200
      %v1528 = vsel %vm1526, %v1495, %v1202
      %v1529 = vsel %vm1526, %v1496, %v1204
      %v1530 = vsel %vm1526, %v1497, %v1206
      %v1531 = vsel %vm1526, %v1498, %v1208
      %v1532 = vsel %vm1526, %v1499, %v1210
      %v1533 = vsel %vm1526, %v1500, %v1212
      %v1534 = vsel %vm1526, %v1501, %v1214
      %v1535 = vsel %vm1526, %v1502, %v1216
      %v1536 = vsel %vm1526, %v1503, %v1218
      %v1537 = vsel %vm1526, %v1504, %v1220
      %v1538 = vsel %vm1526, %v1505, %v1222
      %v1539 = vsel %vm1526, %v1506, %v1224
      %v1540 = vsel %vm1526, %v1507, %v1226
      %v1541 = vsel %vm1526, %v1508, %v1228
      %v1542 = vsel %vm1526, %v1509, %v1230
      %v1543 = vsel %vm1526, %v1510, %v1232
      %v1544 = vsel %vm1526, %v1511, %v1234
      %v1545 = vsel %vm1526, %v1512, %v1236
      %v1546 = vsel %vm1526, %v1513, %v1238
      %v1547 = vsel %vm1526, %v1514, %v1240
      %v1548 = vsel %vm1526, %v1515, %v1242
      %v1549 = vsel %vm1526, %v1516, %v1244
      %v1550 = vsel %vm1526, %v1517, %v1246
      %v1551 = vsel %vm1526, %v1518, %v1248
      %v1552 = vsel %vm1526, %v1519, %v1250
      %v1553 = vsel %vm1526, %v1520, %v1252
      %v1554 = vsel %vm1526, %v1521, %v1254
      %v1555 = vsel %vm1526, %v1522, %v1256
      %v1556 = vsel %vm1526, %v1523, %v1258
      %v1557 = vsel %vm1526, %v1524, %v1260
      %v1558 = vsel %vm1526, %v1525, %v1262
      %v1559 = vld [vmem:[%s1] sm:$0xff]
      %v1560 = vld [vmem:[%s1 + $0x8] sm:$0xff]
      %v1561 = vld [vmem:[%s1 + $0x10] sm:$0xff]
      %v1562 = vld [vmem:[%s1 + $0x18] sm:$0xff]
      %v1563 = vld [vmem:[%s1 + $0x20] sm:$0xf]
      %v1564 = vld [vmem:[%s2] sm:$0x1]
      %v1566 = vperm.slane %v1564, 0
      %vm1568 = vcmask 293888
      %v1570 = vsel %vm1568, %v1527, 0
      %v1573 = vsel %vm1568, %v1528, 0
      %v1576 = vsel %vm1568, %v1529, 0
      %v1579 = vsel %vm1568, %v1530, 0
      %v1582 = vsel %vm1568, %v1531, 0
      %v1585 = vsel %vm1568, %v1532, 0
      %v1588 = vsel %vm1568, %v1533, 0
      %v1591 = vsel %vm1568, %v1534, 0
      %v1594 = vsel %vm1568, %v1535, 0
      %v1597 = vsel %vm1568, %v1536, 0
      %v1600 = vsel %vm1568, %v1537, 0
      %v1603 = vsel %vm1568, %v1538, 0
      %v1606 = vsel %vm1568, %v1539, 0
      %v1609 = vsel %vm1568, %v1540, 0
      %v1612 = vsel %vm1568, %v1541, 0
      %v1615 = vsel %vm1568, %v1542, 0
      %v1618 = vsel %vm1568, %v1543, 0
      %v1621 = vsel %vm1568, %v1544, 0
      %v1624 = vsel %vm1568, %v1545, 0
      %v1627 = vsel %vm1568, %v1546, 0
      %v1630 = vsel %vm1568, %v1547, 0
      %v1633 = vsel %vm1568, %v1548, 0
      %v1636 = vsel %vm1568, %v1549, 0
      %v1639 = vsel %vm1568, %v1550, 0
      %v1642 = vsel %vm1568, %v1551, 0
      %v1645 = vsel %vm1568, %v1552, 0
      %v1648 = vsel %vm1568, %v1553, 0
      %v1651 = vsel %vm1568, %v1554, 0
      %v1654 = vsel %vm1568, %v1555, 0
      %v1657 = vsel %vm1568, %v1556, 0
      %v1660 = vsel %vm1568, %v1557, 0
      %v1663 = vsel %vm1568, %v1558, 0
      %vm1665 = vcmask 1043456
      %v1667 = vsel %vm1665, %v1563, 0
      %1669 = vmatpush.msra.mxu0 0.0
      %1670 = vmatpush.msra.mxu0 0.0
      %1671 = vmatpush.msra.mxu0 0.0
      %1672 = vmatpush.msra.mxu0 0.0
      %1673 = vmatpush.msra.mxu0 0.0
      %1674 = vmatpush.msra.mxu0 0.0
      %1675 = vmatpush.msra.mxu0 0.0
      %1676 = vmatpush.msra.mxu0 0.0
      %1677 = vmatpush.msra.mxu0 0.0
      %1678 = vmatpush.msra.mxu0 0.0
      %1679 = vmatpush.msra.mxu0 0.0
      %1680 = vmatpush.msra.mxu0 %v1667
      %1681 = vmatpush.msra.mxu0 %v1562
      %1682 = vmatpush.msra.mxu0 %v1561
      %1683 = vmatpush.msra.mxu0 %v1560
      %1684 = vmatpush.msra.mxu0 %v1559
      %1685 = vmatmul.f32.gmra.mxu0 %v1570
      %v1686 = vpop.f32.mrf.mxu0
      %v1687 = vadd.f32 %v1566, %v1686
      %1688 = vmatmul.f32.gmra.mxu0 %v1573
      %v1689 = vpop.f32.mrf.mxu0
      %v1690 = vadd.f32 %v1566, %v1689
      %1691 = vmatmul.f32.gmra.mxu0 %v1576
      %v1692 = vpop.f32.mrf.mxu0
      %v1693 = vadd.f32 %v1566, %v1692
      %1694 = vmatmul.f32.gmra.mxu0 %v1579
      %v1695 = vpop.f32.mrf.mxu0
      %v1696 = vadd.f32 %v1566, %v1695
      %1697 = vmatmul.f32.gmra.mxu0 %v1582
      %v1698 = vpop.f32.mrf.mxu0
      %v1699 = vadd.f32 %v1566, %v1698
      %1700 = vmatmul.f32.gmra.mxu0 %v1585
      %v1701 = vpop.f32.mrf.mxu0
      %v1702 = vadd.f32 %v1566, %v1701
      %1703 = vmatmul.f32.gmra.mxu0 %v1588
      %v1704 = vpop.f32.mrf.mxu0
      %v1705 = vadd.f32 %v1566, %v1704
      %1706 = vmatmul.f32.gmra.mxu0 %v1591
      %v1707 = vpop.f32.mrf.mxu0
      %v1708 = vadd.f32 %v1566, %v1707
      %1709 = vmatmul.f32.gmra.mxu0 %v1594
      %v1710 = vpop.f32.mrf.mxu0
      %v1711 = vadd.f32 %v1566, %v1710
      %1712 = vmatmul.f32.gmra.mxu0 %v1597
      %v1713 = vpop.f32.mrf.mxu0
      %v1714 = vadd.f32 %v1566, %v1713
      %1715 = vmatmul.f32.gmra.mxu0 %v1600
      %v1716 = vpop.f32.mrf.mxu0
      %v1717 = vadd.f32 %v1566, %v1716
      %1718 = vmatmul.f32.gmra.mxu0 %v1603
      %v1719 = vpop.f32.mrf.mxu0
      %v1720 = vadd.f32 %v1566, %v1719
      %1721 = vmatmul.f32.gmra.mxu0 %v1606
      %v1722 = vpop.f32.mrf.mxu0
      %v1723 = vadd.f32 %v1566, %v1722
      %1724 = vmatmul.f32.gmra.mxu0 %v1609
      %v1725 = vpop.f32.mrf.mxu0
      %v1726 = vadd.f32 %v1566, %v1725
      %1727 = vmatmul.f32.gmra.mxu0 %v1612
      %v1728 = vpop.f32.mrf.mxu0
      %v1729 = vadd.f32 %v1566, %v1728
      %1730 = vmatmul.f32.gmra.mxu0 %v1615
      %v1731 = vpop.f32.mrf.mxu0
      %v1732 = vadd.f32 %v1566, %v1731
      %1733 = vmatmul.f32.gmra.mxu0 %v1618
      %v1734 = vpop.f32.mrf.mxu0
      %v1735 = vadd.f32 %v1566, %v1734
      %1736 = vmatmul.f32.gmra.mxu0 %v1621
      %v1737 = vpop.f32.mrf.mxu0
      %v1738 = vadd.f32 %v1566, %v1737
      %1739 = vmatmul.f32.gmra.mxu0 %v1624
      %v1740 = vpop.f32.mrf.mxu0
      %v1741 = vadd.f32 %v1566, %v1740
      %1742 = vmatmul.f32.gmra.mxu0 %v1627
      %v1743 = vpop.f32.mrf.mxu0
      %v1744 = vadd.f32 %v1566, %v1743
      %1745 = vmatmul.f32.gmra.mxu0 %v1630
      %v1746 = vpop.f32.mrf.mxu0
      %v1747 = vadd.f32 %v1566, %v1746
      %1748 = vmatmul.f32.gmra.mxu0 %v1633
      %v1749 = vpop.f32.mrf.mxu0
      %v1750 = vadd.f32 %v1566, %v1749
      %1751 = vmatmul.f32.gmra.mxu0 %v1636
      %v1752 = vpop.f32.mrf.mxu0
      %v1753 = vadd.f32 %v1566, %v1752
      %1754 = vmatmul.f32.gmra.mxu0 %v1639
      %v1755 = vpop.f32.mrf.mxu0
      %v1756 = vadd.f32 %v1566, %v1755
      %1757 = vmatmul.f32.gmra.mxu0 %v1642
      %v1758 = vpop.f32.mrf.mxu0
      %v1759 = vadd.f32 %v1566, %v1758
      %1760 = vmatmul.f32.gmra.mxu0 %v1645
      %v1761 = vpop.f32.mrf.mxu0
      %v1762 = vadd.f32 %v1566, %v1761
      %1763 = vmatmul.f32.gmra.mxu0 %v1648
      %v1764 = vpop.f32.mrf.mxu0
      %v1765 = vadd.f32 %v1566, %v1764
      %1766 = vmatmul.f32.gmra.mxu0 %v1651
      %v1767 = vpop.f32.mrf.mxu0
      %v1768 = vadd.f32 %v1566, %v1767
      %1769 = vmatmul.f32.gmra.mxu0 %v1654
      %v1770 = vpop.f32.mrf.mxu0
      %v1771 = vadd.f32 %v1566, %v1770
      %1772 = vmatmul.f32.gmra.mxu0 %v1657
      %v1773 = vpop.f32.mrf.mxu0
      %v1774 = vadd.f32 %v1566, %v1773
      %1775 = vmatmul.f32.gmra.mxu0 %v1660
      %v1776 = vpop.f32.mrf.mxu0
      %v1777 = vadd.f32 %v1566, %v1776
      %1778 = vmatmul.f32.gmra.mxu0 %v1663
      %v1779 = vpop.f32.mrf.mxu0
      %v1780 = vadd.f32 %v1566, %v1779
      %1781 = vdwg.mxu0
      %1782 = vst.msk [vmem:[%s225] sm:$0xff] %vm1526, %v1687
      %1783 = vst.msk [vmem:[%s225 + $0x8] sm:$0xff] %vm1526, %v1690
      %1784 = vst.msk [vmem:[%s225 + $0x10] sm:$0xff] %vm1526, %v1693
      %1785 = vst.msk [vmem:[%s225 + $0x18] sm:$0xff] %vm1526, %v1696
      %1786 = vst.msk [vmem:[%s225 + $0x20] sm:$0xff] %vm1526, %v1699
      %1787 = vst.msk [vmem:[%s225 + $0x28] sm:$0xff] %vm1526, %v1702
      %1788 = vst.msk [vmem:[%s225 + $0x30] sm:$0xff] %vm1526, %v1705
      %1789 = vst.msk [vmem:[%s225 + $0x38] sm:$0xff] %vm1526, %v1708
      %1790 = vst.msk [vmem:[%s225 + $0x40] sm:$0xff] %vm1526, %v1711
      %1791 = vst.msk [vmem:[%s225 + $0x48] sm:$0xff] %vm1526, %v1714
      %1792 = vst.msk [vmem:[%s225 + $0x50] sm:$0xff] %vm1526, %v1717
      %1793 = vst.msk [vmem:[%s225 + $0x58] sm:$0xff] %vm1526, %v1720
      %1794 = vst.msk [vmem:[%s225 + $0x60] sm:$0xff] %vm1526, %v1723
      %1795 = vst.msk [vmem:[%s225 + $0x68] sm:$0xff] %vm1526, %v1726
      %1796 = vst.msk [vmem:[%s225 + $0x70] sm:$0xff] %vm1526, %v1729
      %1797 = vst.msk [vmem:[%s225 + $0x78] sm:$0xff] %vm1526, %v1732
      %1798 = vst.msk [vmem:[%s225 + $0x80] sm:$0xff] %vm1526, %v1735
      %1799 = vst.msk [vmem:[%s225 + $0x88] sm:$0xff] %vm1526, %v1738
      %1800 = vst.msk [vmem:[%s225 + $0x90] sm:$0xff] %vm1526, %v1741
      %1801 = vst.msk [vmem:[%s225 + $0x98] sm:$0xff] %vm1526, %v1744
      %1802 = vst.msk [vmem:[%s225 + $0xa0] sm:$0xff] %vm1526, %v1747
      %1803 = vst.msk [vmem:[%s225 + $0xa8] sm:$0xff] %vm1526, %v1750
      %1804 = vst.msk [vmem:[%s225 + $0xb0] sm:$0xff] %vm1526, %v1753
      %1805 = vst.msk [vmem:[%s225 + $0xb8] sm:$0xff] %vm1526, %v1756
      %1806 = vst.msk [vmem:[%s225 + $0xc0] sm:$0xff] %vm1526, %v1759
      %1807 = vst.msk [vmem:[%s225 + $0xc8] sm:$0xff] %vm1526, %v1762
      %1808 = vst.msk [vmem:[%s225 + $0xd0] sm:$0xff] %vm1526, %v1765
      %1809 = vst.msk [vmem:[%s225 + $0xd8] sm:$0xff] %vm1526, %v1768
      %1810 = vst.msk [vmem:[%s225 + $0xe0] sm:$0xff] %vm1526, %v1771
      %1811 = vst.msk [vmem:[%s225 + $0xe8] sm:$0xff] %vm1526, %v1774
      %1812 = vst.msk [vmem:[%s225 + $0xf0] sm:$0xff] %vm1526, %v1777
      %1813 = vst.msk [vmem:[%s225 + $0xf8] sm:$0xff] %vm1526, %v1780
      %v1814 = vsel %vm1526, %v1687, 0.0
      %v1815 = vsel %vm1526, %v1690, 0.0
      %v1816 = vadd.f32 %v1814, %v1815
      %v1817 = vsel %vm1526, %v1693, 0.0
      %v1818 = vadd.f32 %v1816, %v1817
      %v1819 = vsel %vm1526, %v1696, 0.0
      %v1820 = vadd.f32 %v1818, %v1819
      %v1821 = vsel %vm1526, %v1699, 0.0
      %v1822 = vadd.f32 %v1820, %v1821
      %v1823 = vsel %vm1526, %v1702, 0.0
      %v1824 = vadd.f32 %v1822, %v1823
      %v1825 = vsel %vm1526, %v1705, 0.0
      %v1826 = vadd.f32 %v1824, %v1825
      %v1827 = vsel %vm1526, %v1708, 0.0
      %v1828 = vadd.f32 %v1826, %v1827
      %v1829 = vsel %vm1526, %v1711, 0.0
      %v1830 = vadd.f32 %v1828, %v1829
      %v1831 = vsel %vm1526, %v1714, 0.0
      %v1832 = vadd.f32 %v1830, %v1831
      %v1833 = vsel %vm1526, %v1717, 0.0
      %v1834 = vadd.f32 %v1832, %v1833
      %v1835 = vsel %vm1526, %v1720, 0.0
      %v1836 = vadd.f32 %v1834, %v1835
      %v1837 = vsel %vm1526, %v1723, 0.0
      %v1838 = vadd.f32 %v1836, %v1837
      %v1839 = vsel %vm1526, %v1726, 0.0
      %v1840 = vadd.f32 %v1838, %v1839
      %v1841 = vsel %vm1526, %v1729, 0.0
      %v1842 = vadd.f32 %v1840, %v1841
      %v1843 = vsel %vm1526, %v1732, 0.0
      %v1844 = vadd.f32 %v1842, %v1843
      %v1845 = vsel %vm1526, %v1735, 0.0
      %v1846 = vadd.f32 %v1844, %v1845
      %v1847 = vsel %vm1526, %v1738, 0.0
      %v1848 = vadd.f32 %v1846, %v1847
      %v1849 = vsel %vm1526, %v1741, 0.0
      %v1850 = vadd.f32 %v1848, %v1849
      %v1851 = vsel %vm1526, %v1744, 0.0
      %v1852 = vadd.f32 %v1850, %v1851
      %v1853 = vsel %vm1526, %v1747, 0.0
      %v1854 = vadd.f32 %v1852, %v1853
      %v1855 = vsel %vm1526, %v1750, 0.0
      %v1856 = vadd.f32 %v1854, %v1855
      %v1857 = vsel %vm1526, %v1753, 0.0
      %v1858 = vadd.f32 %v1856, %v1857
      %v1859 = vsel %vm1526, %v1756, 0.0
      %v1860 = vadd.f32 %v1858, %v1859
      %v1861 = vsel %vm1526, %v1759, 0.0
      %v1862 = vadd.f32 %v1860, %v1861
      %v1863 = vsel %vm1526, %v1762, 0.0
      %v1864 = vadd.f32 %v1862, %v1863
      %v1865 = vsel %vm1526, %v1765, 0.0
      %v1866 = vadd.f32 %v1864, %v1865
      %v1867 = vsel %vm1526, %v1768, 0.0
      %v1868 = vadd.f32 %v1866, %v1867
      %v1869 = vsel %vm1526, %v1771, 0.0
      %v1870 = vadd.f32 %v1868, %v1869
      %v1871 = vsel %vm1526, %v1774, 0.0
      %v1872 = vadd.f32 %v1870, %v1871
      %v1873 = vsel %vm1526, %v1777, 0.0
      %v1874 = vadd.f32 %v1872, %v1873
      %v1875 = vsel %vm1526, %v1780, 0.0
      %v1876 = vadd.f32 %v1874, %v1875
      %v1877 = vrot.slane %v1876, 4
      %v1878 = vadd.f32 %v1876, %v1877
      %v1879 = vrot.slane %v1878, 2
      %v1880 = vadd.f32 %v1878, %v1879
      %v1881 = vrot.slane %v1880, 1
      %v1882 = vadd.f32 %v1880, %v1881
      %v1883 = vmul.f32 %v1687, %v1687
      %v1884 = vmul.f32 %v1690, %v1690
      %v1885 = vmul.f32 %v1693, %v1693
      %v1886 = vmul.f32 %v1696, %v1696
      %v1887 = vmul.f32 %v1699, %v1699
      %v1888 = vmul.f32 %v1702, %v1702
      %v1889 = vmul.f32 %v1705, %v1705
      %v1890 = vmul.f32 %v1708, %v1708
      %v1891 = vmul.f32 %v1711, %v1711
      %v1892 = vmul.f32 %v1714, %v1714
      %v1893 = vmul.f32 %v1717, %v1717
      %v1894 = vmul.f32 %v1720, %v1720
      %v1895 = vmul.f32 %v1723, %v1723
      %v1896 = vmul.f32 %v1726, %v1726
      %v1897 = vmul.f32 %v1729, %v1729
      %v1898 = vmul.f32 %v1732, %v1732
      %v1899 = vmul.f32 %v1735, %v1735
      %v1900 = vmul.f32 %v1738, %v1738
      %v1901 = vmul.f32 %v1741, %v1741
      %v1902 = vmul.f32 %v1744, %v1744
      %v1903 = vmul.f32 %v1747, %v1747
      %v1904 = vmul.f32 %v1750, %v1750
      %v1905 = vmul.f32 %v1753, %v1753
      %v1906 = vmul.f32 %v1756, %v1756
      %v1907 = vmul.f32 %v1759, %v1759
      %v1908 = vmul.f32 %v1762, %v1762
      %v1909 = vmul.f32 %v1765, %v1765
      %v1910 = vmul.f32 %v1768, %v1768
      %v1911 = vmul.f32 %v1771, %v1771
      %v1912 = vmul.f32 %v1774, %v1774
      %v1913 = vmul.f32 %v1777, %v1777
      %v1914 = vmul.f32 %v1780, %v1780
      %v1915 = vsel %vm1526, %v1883, 0.0
      %v1916 = vsel %vm1526, %v1884, 0.0
      %v1917 = vadd.f32 %v1915, %v1916
      %v1918 = vsel %vm1526, %v1885, 0.0
      %v1919 = vadd.f32 %v1917, %v1918
      %v1920 = vsel %vm1526, %v1886, 0.0
      %v1921 = vadd.f32 %v1919, %v1920
      %v1922 = vsel %vm1526, %v1887, 0.0
      %v1923 = vadd.f32 %v1921, %v1922
      %v1924 = vsel %vm1526, %v1888, 0.0
      %v1925 = vadd.f32 %v1923, %v1924
      %v1926 = vsel %vm1526, %v1889, 0.0
      %v1927 = vadd.f32 %v1925, %v1926
      %v1928 = vsel %vm1526, %v1890, 0.0
      %v1929 = vadd.f32 %v1927, %v1928
      %v1930 = vsel %vm1526, %v1891, 0.0
      %v1931 = vadd.f32 %v1929, %v1930
      %v1932 = vsel %vm1526, %v1892, 0.0
      %v1933 = vadd.f32 %v1931, %v1932
      %v1934 = vsel %vm1526, %v1893, 0.0
      %v1935 = vadd.f32 %v1933, %v1934
      %v1936 = vsel %vm1526, %v1894, 0.0
      %v1937 = vadd.f32 %v1935, %v1936
      %v1938 = vsel %vm1526, %v1895, 0.0
      %v1939 = vadd.f32 %v1937, %v1938
      %v1940 = vsel %vm1526, %v1896, 0.0
      %v1941 = vadd.f32 %v1939, %v1940
      %v1942 = vsel %vm1526, %v1897, 0.0
      %v1943 = vadd.f32 %v1941, %v1942
      %v1944 = vsel %vm1526, %v1898, 0.0
      %v1945 = vadd.f32 %v1943, %v1944
      %v1946 = vsel %vm1526, %v1899, 0.0
      %v1947 = vadd.f32 %v1945, %v1946
      %v1948 = vsel %vm1526, %v1900, 0.0
      %v1949 = vadd.f32 %v1947, %v1948
      %v1950 = vsel %vm1526, %v1901, 0.0
      %v1951 = vadd.f32 %v1949, %v1950
      %v1952 = vsel %vm1526, %v1902, 0.0
      %v1953 = vadd.f32 %v1951, %v1952
      %v1954 = vsel %vm1526, %v1903, 0.0
      %v1955 = vadd.f32 %v1953, %v1954
      %v1956 = vsel %vm1526, %v1904, 0.0
      %v1957 = vadd.f32 %v1955, %v1956
      %v1958 = vsel %vm1526, %v1905, 0.0
      %v1959 = vadd.f32 %v1957, %v1958
      %v1960 = vsel %vm1526, %v1906, 0.0
      %v1961 = vadd.f32 %v1959, %v1960
      %v1962 = vsel %vm1526, %v1907, 0.0
      %v1963 = vadd.f32 %v1961, %v1962
      %v1964 = vsel %vm1526, %v1908, 0.0
      %v1965 = vadd.f32 %v1963, %v1964
      %v1966 = vsel %vm1526, %v1909, 0.0
      %v1967 = vadd.f32 %v1965, %v1966
      %v1968 = vsel %vm1526, %v1910, 0.0
      %v1969 = vadd.f32 %v1967, %v1968
      %v1970 = vsel %vm1526, %v1911, 0.0
      %v1971 = vadd.f32 %v1969, %v1970
      %v1972 = vsel %vm1526, %v1912, 0.0
      %v1973 = vadd.f32 %v1971, %v1972
      %v1974 = vsel %vm1526, %v1913, 0.0
      %v1975 = vadd.f32 %v1973, %v1974
      %v1976 = vsel %vm1526, %v1914, 0.0
      %v1977 = vadd.f32 %v1975, %v1976
      %v1978 = vrot.slane %v1977, 4
      %v1979 = vadd.f32 %v1977, %v1978
      %v1980 = vrot.slane %v1979, 2
      %v1981 = vadd.f32 %v1979, %v1980
      %v1982 = vrot.slane %v1981, 1
      %v1983 = vadd.f32 %v1981, %v1982
      %vm1984 = vcmask 1040384
      %v1985 = vsel %vm1984, %v1882, %v1983
      %vm1986 = vcmask 254976
      %1987 = vst.msk [vmem:[%s232] sm:$0x3] %vm1986, %v1985
      %s1988 = sadd.s32 %s20, %s21
      %s1989 = smul.u32 16, %s1988
      %p1990 = scmp.lt.s32.totalorder %s1989, 31
      %s1991 = scalar_select %p1990, %s1989, 31
      %s1992 = smul.addr %s1991, 2
      %s1993 = smul.addr %s1992, 8
      %s1994 = scalar_lea.vmem %s3, %s1993
      %s1995 = sadd.s32 %s20, %s21
      %p1996 = scmp.lt.s32.totalorder %s1995, 1
      %s1997 = scalar_select %p1996, %s1995, 1
      %s1998 = smul.addr %s1997, 2
      %s1999 = scalar_lea.vmem %s4, %s1998
      // Predicated region
      $region33: #{upconv.2} parent=31 // pred_check
        %p2000 = pneg %p116
      $region34: #{upconv.2} parent=31 // pred_check_branch
        %2002 = sbr.rel (%p2000) target = $region36
      $region35: #{upconv.2} parent=31 // pred_region
        %s2003 = sadd.s32 %s20, %s21
        %s2004 = smul.u32 16, %s2003
      $region36: #{upconv.2} parent=31 // pred_fallthru
        _
      // Predicated region
      $region37: #{upconv.2} parent=31 // pred_check
        %p2005 = pneg %p144
      $region38: #{upconv.2} parent=31 // pred_check_branch
        %2007 = sbr.rel (%p2005) target = $region40
      $region39: #{upconv.2} parent=31 // pred_region
        %s2008 = sadd.s32 %s20, %s21
      $region40: #{upconv.2} parent=31 // pred_fallthru
        _
    $region32: #{upconv.2} parent=5 // pred_fallthru
      _
    %p2009 = scmp.le.s32.totalorder 2, %s11
    // Predicated region
    $region41: #{upconv.2} parent=5 // pred_check
      %p2010 = pneg %p2009
    $region42: #{upconv.2} parent=5 // pred_check_branch
      %2012 = sbr.rel (%p2010) target = $region44
    $region43: #{upconv.2} parent=5 // pred_region
      %s2013 = ssub.s32 %s11, 2
      // Predicated region
      $region45: #{upconv.2} parent=43 // pred_check
        %p2014 = pneg %p122
      $region46: #{upconv.2} parent=43 // pred_check_branch
        %2016 = sbr.rel (%p2014) target = $region48
      $region47: #{upconv.2} parent=43 // pred_region
        %s2017 = sadd.s32 %s22, %s23
        %s2018 = smul.u32 16, %s2017
        %p2019 = scmp.lt.s32.totalorder %s2018, 31
        %s2020 = scalar_select %p2019, %s2018, 31
        %s2021 = smul.addr %s2020, 2
        %s2022 = smul.addr %s2021, 8
        %s2023 = scalar_lea.vmem %s3, %s2022
      $region48: #{upconv.2} parent=43 // pred_fallthru
        _
      // Predicated region
      $region49: #{upconv.2} parent=43 // pred_check
        %p2024 = pneg %p150
      $region50: #{upconv.2} parent=43 // pred_check_branch
        %2026 = sbr.rel (%p2024) target = $region52
      $region51: #{upconv.2} parent=43 // pred_region
        %s2027 = sadd.s32 %s22, %s23
        %p2028 = scmp.lt.s32.totalorder %s2027, 1
        %s2029 = scalar_select %p2028, %s2027, 1
        %s2030 = smul.addr %s2029, 2
        %s2031 = scalar_lea.vmem %s4, %s2030
      $region52: #{upconv.2} parent=43 // pred_fallthru
        _
    $region44: #{upconv.2} parent=5 // pred_fallthru
      _
  $region6: #{upconv.2} parent=0 // loop_footer
    %s15 = sadd.s32 1, %s11
  $region7: #{upconv.2} parent=0 // loop_footer_branch
    %10 = sbr.rel target = $region3
  $region8: #{upconv.2} parent=0 // loop_exit
    _

</llo_original>
